<compile_context>
chip_gen: v5e
topology: v5e:2x2
jax: 0.10.0
libtpu: 0.0.40
codegen_flags: <defaults>
</compile_context>

<pallas_src>
import functools

import jax
import jax.numpy as jnp
from jax.experimental import pallas as pl

# --- tiny LLaMA/Vicuna config (scaled down from vicuna-7B: 32 layers/32 heads/128 dim) ---
VOCAB = 128
HIDDEN = 32
N_HEADS = 4
HEAD_DIM = HIDDEN // N_HEADS
N_LAYERS = 2            # -> 2*N_LAYERS past_key_value tensors (was 64 in the 32-layer model)
INTERMEDIATE = 64
PAST_LEN = 19           # matches the hard-coded "19" compilation pkv length in CombinedModel
EPS = 1e-6
ROPE_THETA = 10000.0
KV_WIDTH = 2 * N_LAYERS * HIDDEN   # 128 -> lane-dense KV-cache slab


# ----------------------------- Pallas kernel ------------------------------

def _fused_forward_kernel(x_ref, cos_ref, sin_ref, kv_in_ref,
                          wqkv_ref, wo_ref, wgu_ref, wd_ref,
                          gin_ref, gpost_ref, gfin_ref, wlm_ref,
                          logits_ref, kv_out_ref, *, B, S, P):
    """Entire decoder forward (all layers + final norm + lm_head) in one kernel.

    x_ref      : [B*S, H]        token embeddings
    cos/sin    : [B*S, H]        RoPE tables (tiled per head)
    kv_in_ref  : [B*T, 2*L*H]    lane-dense KV cache (past rows filled, new rows zero);
                                 aliased to kv_out_ref
    wqkv_ref   : [L, H, 5H]      (Wq | Wk | Wv | Wq@rot | Wk@rot)
    wo_ref     : [L, H, H]
    wgu_ref    : [L, H, 2I]
    wd_ref     : [L, I, H]
    gin/gpost  : [L, 1, H]       RMSNorm gains
    gfin       : [1, H],  wlm: [H, V]
    logits_ref : [B*S, V]
    kv_out_ref : [B*T, 2*L*H]
    """
    T = P + S
    H = HIDDEN
    D = HEAD_DIM
    scale = 1.0 / (D ** 0.5)

    # Causal mask only needed when there is more than one new token (prefill).
    if S > 1:
        ii = jax.lax.broadcasted_iota(jnp.int32, (S, S), 0)
        jj = jax.lax.broadcasted_iota(jnp.int32, (S, S), 1)
        causal = jnp.where(jj <= ii, 0.0, -1e9).astype(jnp.float32)

    if P > 0:
        kv_all = kv_in_ref[...]            # past K/V, lane-dense slab
        kv_out_ref[...] = kv_all           # keep past rows in the aliased output block

    gfin = gfin_ref[...]
    wlm = wlm_ref[...]

    for b in range(B):                     # static unroll (B == 1 here)
        r0 = b * S
        x_b = x_ref[r0:r0 + S, :]
        cos_b = cos_ref[r0:r0 + S, :]
        sin_b = sin_ref[r0:r0 + S, :]

        new_kv = []                        # per-layer K, V slabs -> one lane-dense store
        for lyr in range(N_LAYERS):        # static unroll over layers (single kernel)
            wqkv = wqkv_ref[lyr]           # [H, 5H]
            wo = wo_ref[lyr]               # [H, H]
            wgu = wgu_ref[lyr]             # [H, 2I]
            wd = wd_ref[lyr]               # [I, H]
            g_in = gin_ref[lyr]            # [1, H]
            g_post = gpost_ref[lyr]        # [1, H]

            # --- input RMSNorm + fused QKV(+rotated QK) projection: one MXU matmul ---
            xn = x_b * jax.lax.rsqrt(jnp.mean(x_b * x_b, axis=-1, keepdims=True) + EPS) * g_in
            proj = jnp.dot(xn, wqkv, preferred_element_type=jnp.float32)     # [S, 5H]

            # RoPE with rotate_half pre-folded into the weights (no rot matmul in-kernel).
            q = proj[:, 0 * H:1 * H] * cos_b + proj[:, 3 * H:4 * H] * sin_b
            k = proj[:, 1 * H:2 * H] * cos_b + proj[:, 4 * H:5 * H] * sin_b
            v = proj[:, 2 * H:3 * H]
            new_kv.append(k)
            new_kv.append(v)

            # --- attention over all heads (static unroll; two-block past|new softmax) ---
            o_heads = []
            for hd in range(N_HEADS):
                c0 = hd * D
                q_h = q[:, c0:c0 + D] * scale
                k_h = k[:, c0:c0 + D]
                v_h = v[:, c0:c0 + D]

                s_new = jnp.dot(q_h, k_h.T, preferred_element_type=jnp.float32)
                if S > 1:
                    s_new = s_new + causal
                if P > 0:
                    kcol = lyr * 2 * H + c0
                    vcol = lyr * 2 * H + H + c0
                    pk_h = kv_all[b * T:b * T + P, kcol:kcol + D]            # [P, D]
                    pv_h = kv_all[b * T:b * T + P, vcol:vcol + D]            # [P, D]
                    s_past = jnp.dot(q_h, pk_h.T, preferred_element_type=jnp.float32)
                    m = jnp.maximum(jnp.max(s_new, axis=-1, keepdims=True),
                                    jnp.max(s_past, axis=-1, keepdims=True))
                    p_new = jnp.exp(s_new - m)
                    p_past = jnp.exp(s_past - m)
                    denom = (jnp.sum(p_new, axis=-1, keepdims=True)
                             + jnp.sum(p_past, axis=-1, keepdims=True))
                    o_h = (jnp.dot(p_new, v_h, preferred_element_type=jnp.float32)
                           + jnp.dot(p_past, pv_h, preferred_element_type=jnp.float32))
                else:
                    m = jnp.max(s_new, axis=-1, keepdims=True)
                    p_new = jnp.exp(s_new - m)
                    denom = jnp.sum(p_new, axis=-1, keepdims=True)
                    o_h = jnp.dot(p_new, v_h, preferred_element_type=jnp.float32)
                o_heads.append(o_h * pl.reciprocal(denom, approx=True))

            # Single [S,H]@[H,H] output projection (head concat folded into one matmul).
            attn = jnp.concatenate(o_heads, axis=-1)                         # [S, H]
            x_b = x_b + jnp.dot(attn, wo, preferred_element_type=jnp.float32)

            # --- post-attention RMSNorm + SwiGLU MLP (fused gate/up matmul) ---
            h2 = x_b * jax.lax.rsqrt(jnp.mean(x_b * x_b, axis=-1, keepdims=True) + EPS) * g_post
            gu = jnp.dot(h2, wgu, preferred_element_type=jnp.float32)        # [S, 2I]
            g = gu[:, :INTERMEDIATE]
            u = gu[:, INTERMEDIATE:]
            x_b = x_b + jnp.dot(g * jax.nn.sigmoid(g) * u, wd,
                                preferred_element_type=jnp.float32)

        # One lane-dense (128-wide) store of all new K/V rows for this batch element.
        kv_out_ref[pl.ds(b * T + P, S), :] = jnp.concatenate(new_kv, axis=-1)

        # --- final RMSNorm + lm_head (VOCAB = 128 -> lane-dense logits) ---
        hf = x_b * jax.lax.rsqrt(jnp.mean(x_b * x_b, axis=-1, keepdims=True) + EPS) * gfin
        logits_ref[r0:r0 + S, :] = jnp.dot(hf, wlm, preferred_element_type=jnp.float32)


# ------------------------------ JAX glue ----------------------------------

def _rotate_half_matrix():
    """[H, H] block-diagonal sign-permutation so that x @ rot == rotate_half(x) per head."""
    d2 = HEAD_DIM // 2
    p = jnp.zeros((HEAD_DIM, HEAD_DIM), jnp.float32)
    p = p.at[d2:, :d2].set(-jnp.eye(d2, dtype=jnp.float32))
    p = p.at[:d2, d2:].set(jnp.eye(d2, dtype=jnp.float32))
    return jnp.kron(jnp.eye(N_HEADS, dtype=jnp.float32), p)


def _rope_tables(B, S, past_len):
    positions = jnp.arange(past_len, past_len + S, dtype=jnp.float32)
    inv_freq = 1.0 / (ROPE_THETA ** (jnp.arange(0, HEAD_DIM, 2, dtype=jnp.float32) / HEAD_DIM))
    freqs = positions[:, None] * inv_freq[None, :]                     # [S, D/2]
    emb = jnp.concatenate([freqs, freqs], axis=-1)                     # [S, D]
    cos = jnp.tile(jnp.tile(jnp.cos(emb), (1, N_HEADS)), (B, 1))       # [B*S, H]
    sin = jnp.tile(jnp.tile(jnp.sin(emb), (1, N_HEADS)), (B, 1))       # [B*S, H]
    return cos, sin


def init_params(key):
    std = 0.02
    keys = jax.random.split(key, 2 + N_LAYERS)
    rot = _rotate_half_matrix()
    wqkv_ext, wo, wgu, wd = [], [], [], []
    for i in range(N_LAYERS):
        lk = jax.random.split(keys[2 + i], 4)
        wqkv = std * jax.random.normal(lk[0], (HIDDEN, 3 * HIDDEN), jnp.float32)
        wq = wqkv[:, :HIDDEN]
        wk = wqkv[:, HIDDEN:2 * HIDDEN]
        # Fold rotate_half into the projection: (Wq | Wk | Wv | Wq@rot | Wk@rot).
        wqkv_ext.append(jnp.concatenate([wqkv, wq @ rot, wk @ rot], axis=1))
        wo.append(std * jax.random.normal(lk[1], (HIDDEN, HIDDEN), jnp.float32))
        wgu.append(std * jax.random.normal(lk[2], (HIDDEN, 2 * INTERMEDIATE), jnp.float32))
        wd.append(std * jax.random.normal(lk[3], (INTERMEDIATE, HIDDEN), jnp.float32))
    return {
        "embed": std * jax.random.normal(keys[0], (VOCAB, HIDDEN), jnp.float32),
        "lm_head": std * jax.random.normal(keys[1], (HIDDEN, VOCAB), jnp.float32),
        "final_norm": jnp.ones((1, HIDDEN), jnp.float32),
        "wqkv_ext": jnp.stack(wqkv_ext),                       # [L, H, 5H]
        "wo": jnp.stack(wo),                                   # [L, H, H]
        "wgu": jnp.stack(wgu),                                 # [L, H, 2I]
        "wd": jnp.stack(wd),                                   # [L, I, H]
        "in_norm": jnp.ones((N_LAYERS, 1, HIDDEN), jnp.float32),
        "post_norm": jnp.ones((N_LAYERS, 1, HIDDEN), jnp.float32),
    }


def llama_forward(params, input_ids, past_kv=None):
    """LLaMA decoder forward.  Returns (logits [B,S,V], present_kv list of (K,V))."""
    B, S = input_ids.shape
    P = 0 if past_kv is None else past_kv[0][0].shape[2]
    T = P + S
    x = jnp.take(params["embed"], input_ids.reshape(-1), axis=0)       # [B*S, H]
    cos, sin = _rope_tables(B, S, P)

    # Lane-dense KV cache slab [B*T, 2*L*H]: past rows filled, new rows zero.
    if past_kv is None:
        kv_init = jnp.zeros((B * T, KV_WIDTH), jnp.float32)
    else:
        cols = []
        for (pk, pv) in past_kv:                                        # each [B, nh, P, D]
            cols.append(jnp.transpose(pk, (0, 2, 1, 3)).reshape(B, P, HIDDEN))
            cols.append(jnp.transpose(pv, (0, 2, 1, 3)).reshape(B, P, HIDDEN))
        past_slab = jnp.concatenate(cols, axis=-1)                      # [B, P, 2LH]
        kv_init = jnp.pad(past_slab, ((0, 0), (0, S), (0, 0))).reshape(B * T, KV_WIDTH)

    kern = functools.partial(_fused_forward_kernel, B=B, S=S, P=P)
    logits, kv_out = pl.pallas_call(
        kern,
        out_shape=(jax.ShapeDtypeStruct((B * S, VOCAB), jnp.float32),
                   jax.ShapeDtypeStruct((B * T, KV_WIDTH), jnp.float32)),
        # Alias the KV cache slab in-place: kernel only (re)writes what it must.
        input_output_aliases={3: 1},
    )(x, cos, sin, kv_init,
      params["wqkv_ext"], params["wo"], params["wgu"], params["wd"],
      params["in_norm"], params["post_norm"], params["final_norm"], params["lm_head"])

    # Unpack the lane-dense slab back into the HF [B, nh, T, D] convention (wrapper-side
    # layout plumbing only).
    kv5 = kv_out.reshape(B, T, N_LAYERS, 2, N_HEADS, HEAD_DIM)
    present_kv = []
    for li in range(N_LAYERS):
        k_l = jnp.transpose(kv5[:, :, li, 0], (0, 2, 1, 3))
        v_l = jnp.transpose(kv5[:, :, li, 1], (0, 2, 1, 3))
        present_kv.append((k_l, v_l))
    return logits.reshape(B, S, VOCAB), present_kv


def first_vicuna_forward(params, input_ids):
    logits, pkv = llama_forward(params, input_ids, past_kv=None)
    out = [logits]
    for (k, v) in pkv:
        out.append(k)
        out.append(v)
    return tuple(out)


def second_vicuna_forward(params, token, *flat_pkv):
    assert len(flat_pkv) == 2 * N_LAYERS
    past_kv = tuple((flat_pkv[2 * i], flat_pkv[2 * i + 1]) for i in range(N_LAYERS))
    logits, pkv = llama_forward(params, token, past_kv=past_kv)
    out = [logits]
    for (k, v) in pkv:
        out.append(k)
        out.append(v)
    return tuple(out)


def combined_forward(params_first, params_second, input_ids):
    # Mirrors CombinedModel.forward: run first (prefill) model, then run the second
    # (decode) model on a zero token with zero past_key_values; return the second output.
    # Under jax.jit the unused prefill result is dead-code-eliminated.
    _ = first_vicuna_forward(params_first, input_ids)
    compilation_input_ids = jnp.zeros((1, 1), dtype=jnp.int32)
    pkv = tuple(jnp.zeros((1, N_HEADS, PAST_LEN, HEAD_DIM), jnp.float32)
                for _ in range(2 * N_LAYERS))
    return second_vicuna_forward(params_second, compilation_input_ids, *pkv)


if __name__ == "__main__":
    key = jax.random.PRNGKey(0)
    kp1, kp2, kx = jax.random.split(key, 3)
    params_first = init_params(kp1)
    params_second = init_params(kp2)

    # Small prompt: batch=1, seq=8 token ids.
    input_ids = jax.random.randint(kx, (1, 8), 0, VOCAB, dtype=jnp.int32)

    # Exercise the prefill path explicitly (it is DCE'd inside combined_forward).
    first_out = jax.jit(first_vicuna_forward)(params_first, input_ids)
    jax.block_until_ready(first_out)
    assert first_out[0].shape == (1, 8, VOCAB)
    for t in first_out[1:]:
        assert t.shape == (1, N_HEADS, 8, HEAD_DIM)

    # CombinedModel.forward equivalent, fully jitted.
    out = jax.jit(combined_forward)(params_first, params_second, input_ids)
    jax.block_until_ready(out)

    assert out[0].shape == (1, 1, VOCAB)
    for t in out[1:]:
        assert t.shape == (1, N_HEADS, PAST_LEN + 1, HEAD_DIM)
    print("KERNEL_OK")
</pallas_src>

<mosaic_0001>
module attributes {stable_mosaic.version = 11 : i64} {
  func.func @_fused_forward_kernel(%arg0: memref<8x32xf32, #tpu.memory_space<vmem>>, %arg1: memref<8x32xf32, #tpu.memory_space<vmem>>, %arg2: memref<8x32xf32, #tpu.memory_space<vmem>>, %arg3: memref<8x128xf32, #tpu.memory_space<vmem>>, %arg4: memref<2x32x160xf32, #tpu.memory_space<vmem>>, %arg5: memref<2x32x32xf32, #tpu.memory_space<vmem>>, %arg6: memref<2x32x128xf32, #tpu.memory_space<vmem>>, %arg7: memref<2x64x32xf32, #tpu.memory_space<vmem>>, %arg8: memref<2x1x32xf32, #tpu.memory_space<vmem>>, %arg9: memref<2x1x32xf32, #tpu.memory_space<vmem>>, %arg10: memref<1x32xf32, #tpu.memory_space<vmem>>, %arg11: memref<32x128xf32, #tpu.memory_space<vmem>>, %arg12: memref<8x128xf32, #tpu.memory_space<vmem>>, %arg13: memref<8x128xf32, #tpu.memory_space<vmem>>) attributes {dimension_semantics = [], scalar_prefetch = 0 : i64, scratch_operands = 0 : i64, tpu.core_type = #tpu.core_type<tc>} {
    %0 = tpu.iota {dimensions = array<i32: 0>} : vector<8x8xi32>
    %1 = tpu.iota {dimensions = array<i32: 1>} : vector<8x8xi32>
    %2 = arith.cmpi sle, %1, %0 : vector<8x8xi32>
    %cst = arith.constant 0.000000e+00 : f32
    %cst_0 = arith.constant -1.000000e+09 : f32
    %3 = vector.broadcast %cst : f32 to vector<8x8xf32>
    %4 = vector.broadcast %cst_0 : f32 to vector<8x8xf32>
    %5 = arith.select %2, %3, %4 : vector<8x8xi1>, vector<8x8xf32>
    %c0 = arith.constant 0 : index
    %c0_1 = arith.constant 0 : index
    %6 = vector.load %arg10[%c0, %c0_1] : memref<1x32xf32, #tpu.memory_space<vmem>>, vector<1x32xf32>
    %c0_2 = arith.constant 0 : index
    %c0_3 = arith.constant 0 : index
    %7 = vector.load %arg11[%c0_2, %c0_3] : memref<32x128xf32, #tpu.memory_space<vmem>>, vector<32x128xf32>
    %c0_4 = arith.constant 0 : index
    %c0_5 = arith.constant 0 : index
    %8 = vector.load %arg0[%c0_4, %c0_5] : memref<8x32xf32, #tpu.memory_space<vmem>>, vector<8x32xf32>
    %c0_6 = arith.constant 0 : index
    %c0_7 = arith.constant 0 : index
    %9 = vector.load %arg1[%c0_6, %c0_7] : memref<8x32xf32, #tpu.memory_space<vmem>>, vector<8x32xf32>
    %c0_8 = arith.constant 0 : index
    %c0_9 = arith.constant 0 : index
    %10 = vector.load %arg2[%c0_8, %c0_9] : memref<8x32xf32, #tpu.memory_space<vmem>>, vector<8x32xf32>
    %c0_10 = arith.constant 0 : index
    %c0_11 = arith.constant 0 : index
    %c0_12 = arith.constant 0 : index
    %11 = vector.load %arg4[%c0_10, %c0_11, %c0_12] : memref<2x32x160xf32, #tpu.memory_space<vmem>>, vector<1x32x160xf32>
    %12 = vector.shape_cast %11 : vector<1x32x160xf32> to vector<32x160xf32>
    %c0_13 = arith.constant 0 : index
    %c0_14 = arith.constant 0 : index
    %c0_15 = arith.constant 0 : index
    %13 = vector.load %arg5[%c0_13, %c0_14, %c0_15] : memref<2x32x32xf32, #tpu.memory_space<vmem>>, vector<1x32x32xf32>
    %14 = vector.shape_cast %13 : vector<1x32x32xf32> to vector<32x32xf32>
    %c0_16 = arith.constant 0 : index
    %c0_17 = arith.constant 0 : index
    %c0_18 = arith.constant 0 : index
    %15 = vector.load %arg6[%c0_16, %c0_17, %c0_18] : memref<2x32x128xf32, #tpu.memory_space<vmem>>, vector<1x32x128xf32>
    %16 = vector.shape_cast %15 : vector<1x32x128xf32> to vector<32x128xf32>
    %c0_19 = arith.constant 0 : index
    %c0_20 = arith.constant 0 : index
    %c0_21 = arith.constant 0 : index
    %17 = vector.load %arg7[%c0_19, %c0_20, %c0_21] : memref<2x64x32xf32, #tpu.memory_space<vmem>>, vector<1x64x32xf32>
    %18 = vector.shape_cast %17 : vector<1x64x32xf32> to vector<64x32xf32>
    %c0_22 = arith.constant 0 : index
    %c0_23 = arith.constant 0 : index
    %c0_24 = arith.constant 0 : index
    %19 = vector.load %arg8[%c0_22, %c0_23, %c0_24] : memref<2x1x32xf32, #tpu.memory_space<vmem>>, vector<1x1x32xf32>
    %20 = vector.shape_cast %19 : vector<1x1x32xf32> to vector<1x32xf32>
    %c0_25 = arith.constant 0 : index
    %c0_26 = arith.constant 0 : index
    %c0_27 = arith.constant 0 : index
    %21 = vector.load %arg9[%c0_25, %c0_26, %c0_27] : memref<2x1x32xf32, #tpu.memory_space<vmem>>, vector<1x1x32xf32>
    %22 = vector.shape_cast %21 : vector<1x1x32xf32> to vector<1x32xf32>
    %23 = arith.mulf %8, %8 : vector<8x32xf32>
    %cst_28 = arith.constant dense<0.000000e+00> : vector<8xf32>
    %24 = vector.multi_reduction <add>, %23, %cst_28 [1] : vector<8x32xf32> to vector<8xf32>
    %25 = vector.shape_cast %24 : vector<8xf32> to vector<8x1xf32>
    %cst_29 = arith.constant 3.200000e+01 : f32
    %26 = vector.broadcast %cst_29 : f32 to vector<8x1xf32>
    %27 = arith.divf %25, %26 : vector<8x1xf32>
    %cst_30 = arith.constant 9.99999997E-7 : f32
    %28 = vector.broadcast %cst_30 : f32 to vector<8x1xf32>
    %29 = arith.addf %27, %28 : vector<8x1xf32>
    %30 = math.rsqrt %29 : vector<8x1xf32>
    %31 = vector.broadcast %30 : vector<8x1xf32> to vector<8x32xf32>
    %32 = arith.mulf %8, %31 : vector<8x32xf32>
    %33 = vector.broadcast %20 : vector<1x32xf32> to vector<8x32xf32>
    %34 = arith.mulf %32, %33 : vector<8x32xf32>
    %cst_31 = arith.constant dense<0.000000e+00> : vector<8x160xf32>
    %35 = tpu.matmul %34, %12, %cst_31 {dimension_numbers = #tpu.dot_dimension_numbers<[1], [0], [0], [1], [0, 0, 1, 1], [], []>} : vector<8x32xf32>, vector<32x160xf32>, vector<8x160xf32> -> vector<8x160xf32>
    %36 = vector.extract_strided_slice %35 {offsets = [0, 0], sizes = [8, 32], strides = [1, 1]} : vector<8x160xf32> to vector<8x32xf32>
    %37 = arith.mulf %36, %9 : vector<8x32xf32>
    %38 = vector.extract_strided_slice %35 {offsets = [0, 96], sizes = [8, 32], strides = [1, 1]} : vector<8x160xf32> to vector<8x32xf32>
    %39 = arith.mulf %38, %10 : vector<8x32xf32>
    %40 = arith.addf %37, %39 : vector<8x32xf32>
    %41 = vector.extract_strided_slice %35 {offsets = [0, 32], sizes = [8, 32], strides = [1, 1]} : vector<8x160xf32> to vector<8x32xf32>
    %42 = arith.mulf %41, %9 : vector<8x32xf32>
    %43 = vector.extract_strided_slice %35 {offsets = [0, 128], sizes = [8, 32], strides = [1, 1]} : vector<8x160xf32> to vector<8x32xf32>
    %44 = arith.mulf %43, %10 : vector<8x32xf32>
    %45 = arith.addf %42, %44 : vector<8x32xf32>
    %46 = vector.extract_strided_slice %35 {offsets = [0, 64], sizes = [8, 32], strides = [1, 1]} : vector<8x160xf32> to vector<8x32xf32>
    %47 = vector.extract_strided_slice %40 {offsets = [0, 0], sizes = [8, 8], strides = [1, 1]} : vector<8x32xf32> to vector<8x8xf32>
    %cst_32 = arith.constant 0.353553385 : f32
    %48 = vector.broadcast %cst_32 : f32 to vector<8x8xf32>
    %49 = arith.mulf %47, %48 : vector<8x8xf32>
    %50 = vector.extract_strided_slice %45 {offsets = [0, 0], sizes = [8, 8], strides = [1, 1]} : vector<8x32xf32> to vector<8x8xf32>
    %51 = vector.extract_strided_slice %46 {offsets = [0, 0], sizes = [8, 8], strides = [1, 1]} : vector<8x32xf32> to vector<8x8xf32>
    %52 = tpu.transpose %50, [1, 0] : vector<8x8xf32> -> vector<8x8xf32>
    %cst_33 = arith.constant dense<0.000000e+00> : vector<8x8xf32>
    %53 = tpu.matmul %49, %52, %cst_33 {dimension_numbers = #tpu.dot_dimension_numbers<[1], [0], [0], [1], [0, 0, 1, 1], [], []>} : vector<8x8xf32>, vector<8x8xf32>, vector<8x8xf32> -> vector<8x8xf32>
    %54 = arith.addf %53, %5 : vector<8x8xf32>
    %cst_34 = arith.constant dense<0xFF800000> : vector<8xf32>
    %55 = vector.multi_reduction <maximumf>, %54, %cst_34 [1] : vector<8x8xf32> to vector<8xf32>
    %56 = vector.shape_cast %55 : vector<8xf32> to vector<8x1xf32>
    %57 = vector.broadcast %56 : vector<8x1xf32> to vector<8x8xf32>
    %58 = arith.subf %54, %57 : vector<8x8xf32>
    %59 = math.exp %58 : vector<8x8xf32>
    %cst_35 = arith.constant dense<0.000000e+00> : vector<8xf32>
    %60 = vector.multi_reduction <add>, %59, %cst_35 [1] : vector<8x8xf32> to vector<8xf32>
    %61 = vector.shape_cast %60 : vector<8xf32> to vector<8x1xf32>
    %cst_36 = arith.constant dense<0.000000e+00> : vector<8x8xf32>
    %62 = tpu.matmul %59, %51, %cst_36 {dimension_numbers = #tpu.dot_dimension_numbers<[1], [0], [0], [1], [0, 0, 1, 1], [], []>} : vector<8x8xf32>, vector<8x8xf32>, vector<8x8xf32> -> vector<8x8xf32>
    %63 = tpu.reciprocal %61 {approx = true} : vector<8x1xf32> -> vector<8x1xf32>
    %64 = vector.broadcast %63 : vector<8x1xf32> to vector<8x8xf32>
    %65 = arith.mulf %62, %64 : vector<8x8xf32>
    %66 = vector.extract_strided_slice %40 {offsets = [0, 8], sizes = [8, 8], strides = [1, 1]} : vector<8x32xf32> to vector<8x8xf32>
    %cst_37 = arith.constant 0.353553385 : f32
    %67 = vector.broadcast %cst_37 : f32 to vector<8x8xf32>
    %68 = arith.mulf %66, %67 : vector<8x8xf32>
    %69 = vector.extract_strided_slice %45 {offsets = [0, 8], sizes = [8, 8], strides = [1, 1]} : vector<8x32xf32> to vector<8x8xf32>
    %70 = vector.extract_strided_slice %46 {offsets = [0, 8], sizes = [8, 8], strides = [1, 1]} : vector<8x32xf32> to vector<8x8xf32>
    %71 = tpu.transpose %69, [1, 0] : vector<8x8xf32> -> vector<8x8xf32>
    %cst_38 = arith.constant dense<0.000000e+00> : vector<8x8xf32>
    %72 = tpu.matmul %68, %71, %cst_38 {dimension_numbers = #tpu.dot_dimension_numbers<[1], [0], [0], [1], [0, 0, 1, 1], [], []>} : vector<8x8xf32>, vector<8x8xf32>, vector<8x8xf32> -> vector<8x8xf32>
    %73 = arith.addf %72, %5 : vector<8x8xf32>
    %cst_39 = arith.constant dense<0xFF800000> : vector<8xf32>
    %74 = vector.multi_reduction <maximumf>, %73, %cst_39 [1] : vector<8x8xf32> to vector<8xf32>
    %75 = vector.shape_cast %74 : vector<8xf32> to vector<8x1xf32>
    %76 = vector.broadcast %75 : vector<8x1xf32> to vector<8x8xf32>
    %77 = arith.subf %73, %76 : vector<8x8xf32>
    %78 = math.exp %77 : vector<8x8xf32>
    %cst_40 = arith.constant dense<0.000000e+00> : vector<8xf32>
    %79 = vector.multi_reduction <add>, %78, %cst_40 [1] : vector<8x8xf32> to vector<8xf32>
    %80 = vector.shape_cast %79 : vector<8xf32> to vector<8x1xf32>
    %cst_41 = arith.constant dense<0.000000e+00> : vector<8x8xf32>
    %81 = tpu.matmul %78, %70, %cst_41 {dimension_numbers = #tpu.dot_dimension_numbers<[1], [0], [0], [1], [0, 0, 1, 1], [], []>} : vector<8x8xf32>, vector<8x8xf32>, vector<8x8xf32> -> vector<8x8xf32>
    %82 = tpu.reciprocal %80 {approx = true} : vector<8x1xf32> -> vector<8x1xf32>
    %83 = vector.broadcast %82 : vector<8x1xf32> to vector<8x8xf32>
    %84 = arith.mulf %81, %83 : vector<8x8xf32>
    %85 = vector.extract_strided_slice %40 {offsets = [0, 16], sizes = [8, 8], strides = [1, 1]} : vector<8x32xf32> to vector<8x8xf32>
    %cst_42 = arith.constant 0.353553385 : f32
    %86 = vector.broadcast %cst_42 : f32 to vector<8x8xf32>
    %87 = arith.mulf %85, %86 : vector<8x8xf32>
    %88 = vector.extract_strided_slice %45 {offsets = [0, 16], sizes = [8, 8], strides = [1, 1]} : vector<8x32xf32> to vector<8x8xf32>
    %89 = vector.extract_strided_slice %46 {offsets = [0, 16], sizes = [8, 8], strides = [1, 1]} : vector<8x32xf32> to vector<8x8xf32>
    %90 = tpu.transpose %88, [1, 0] : vector<8x8xf32> -> vector<8x8xf32>
    %cst_43 = arith.constant dense<0.000000e+00> : vector<8x8xf32>
    %91 = tpu.matmul %87, %90, %cst_43 {dimension_numbers = #tpu.dot_dimension_numbers<[1], [0], [0], [1], [0, 0, 1, 1], [], []>} : vector<8x8xf32>, vector<8x8xf32>, vector<8x8xf32> -> vector<8x8xf32>
    %92 = arith.addf %91, %5 : vector<8x8xf32>
    %cst_44 = arith.constant dense<0xFF800000> : vector<8xf32>
    %93 = vector.multi_reduction <maximumf>, %92, %cst_44 [1] : vector<8x8xf32> to vector<8xf32>
    %94 = vector.shape_cast %93 : vector<8xf32> to vector<8x1xf32>
    %95 = vector.broadcast %94 : vector<8x1xf32> to vector<8x8xf32>
    %96 = arith.subf %92, %95 : vector<8x8xf32>
    %97 = math.exp %96 : vector<8x8xf32>
    %cst_45 = arith.constant dense<0.000000e+00> : vector<8xf32>
    %98 = vector.multi_reduction <add>, %97, %cst_45 [1] : vector<8x8xf32> to vector<8xf32>
    %99 = vector.shape_cast %98 : vector<8xf32> to vector<8x1xf32>
    %cst_46 = arith.constant dense<0.000000e+00> : vector<8x8xf32>
    %100 = tpu.matmul %97, %89, %cst_46 {dimension_numbers = #tpu.dot_dimension_numbers<[1], [0], [0], [1], [0, 0, 1, 1], [], []>} : vector<8x8xf32>, vector<8x8xf32>, vector<8x8xf32> -> vector<8x8xf32>
    %101 = tpu.reciprocal %99 {approx = true} : vector<8x1xf32> -> vector<8x1xf32>
    %102 = vector.broadcast %101 : vector<8x1xf32> to vector<8x8xf32>
    %103 = arith.mulf %100, %102 : vector<8x8xf32>
    %104 = vector.extract_strided_slice %40 {offsets = [0, 24], sizes = [8, 8], strides = [1, 1]} : vector<8x32xf32> to vector<8x8xf32>
    %cst_47 = arith.constant 0.353553385 : f32
    %105 = vector.broadcast %cst_47 : f32 to vector<8x8xf32>
    %106 = arith.mulf %104, %105 : vector<8x8xf32>
    %107 = vector.extract_strided_slice %45 {offsets = [0, 24], sizes = [8, 8], strides = [1, 1]} : vector<8x32xf32> to vector<8x8xf32>
    %108 = vector.extract_strided_slice %46 {offsets = [0, 24], sizes = [8, 8], strides = [1, 1]} : vector<8x32xf32> to vector<8x8xf32>
    %109 = tpu.transpose %107, [1, 0] : vector<8x8xf32> -> vector<8x8xf32>
    %cst_48 = arith.constant dense<0.000000e+00> : vector<8x8xf32>
    %110 = tpu.matmul %106, %109, %cst_48 {dimension_numbers = #tpu.dot_dimension_numbers<[1], [0], [0], [1], [0, 0, 1, 1], [], []>} : vector<8x8xf32>, vector<8x8xf32>, vector<8x8xf32> -> vector<8x8xf32>
    %111 = arith.addf %110, %5 : vector<8x8xf32>
    %cst_49 = arith.constant dense<0xFF800000> : vector<8xf32>
    %112 = vector.multi_reduction <maximumf>, %111, %cst_49 [1] : vector<8x8xf32> to vector<8xf32>
    %113 = vector.shape_cast %112 : vector<8xf32> to vector<8x1xf32>
    %114 = vector.broadcast %113 : vector<8x1xf32> to vector<8x8xf32>
    %115 = arith.subf %111, %114 : vector<8x8xf32>
    %116 = math.exp %115 : vector<8x8xf32>
    %cst_50 = arith.constant dense<0.000000e+00> : vector<8xf32>
    %117 = vector.multi_reduction <add>, %116, %cst_50 [1] : vector<8x8xf32> to vector<8xf32>
    %118 = vector.shape_cast %117 : vector<8xf32> to vector<8x1xf32>
    %cst_51 = arith.constant dense<0.000000e+00> : vector<8x8xf32>
    %119 = tpu.matmul %116, %108, %cst_51 {dimension_numbers = #tpu.dot_dimension_numbers<[1], [0], [0], [1], [0, 0, 1, 1], [], []>} : vector<8x8xf32>, vector<8x8xf32>, vector<8x8xf32> -> vector<8x8xf32>
    %120 = tpu.reciprocal %118 {approx = true} : vector<8x1xf32> -> vector<8x1xf32>
    %121 = vector.broadcast %120 : vector<8x1xf32> to vector<8x8xf32>
    %122 = arith.mulf %119, %121 : vector<8x8xf32>
    %123 = tpu.concatenate %65, %84, %103, %122 in 1 : vector<8x8xf32>, vector<8x8xf32>, vector<8x8xf32>, vector<8x8xf32> -> vector<8x32xf32>
    %cst_52 = arith.constant dense<0.000000e+00> : vector<8x32xf32>
    %124 = tpu.matmul %123, %14, %cst_52 {dimension_numbers = #tpu.dot_dimension_numbers<[1], [0], [0], [1], [0, 0, 1, 1], [], []>} : vector<8x32xf32>, vector<32x32xf32>, vector<8x32xf32> -> vector<8x32xf32>
    %125 = arith.addf %8, %124 : vector<8x32xf32>
    %126 = arith.mulf %125, %125 : vector<8x32xf32>
    %cst_53 = arith.constant dense<0.000000e+00> : vector<8xf32>
    %127 = vector.multi_reduction <add>, %126, %cst_53 [1] : vector<8x32xf32> to vector<8xf32>
    %128 = vector.shape_cast %127 : vector<8xf32> to vector<8x1xf32>
    %cst_54 = arith.constant 3.200000e+01 : f32
    %129 = vector.broadcast %cst_54 : f32 to vector<8x1xf32>
    %130 = arith.divf %128, %129 : vector<8x1xf32>
    %cst_55 = arith.constant 9.99999997E-7 : f32
    %131 = vector.broadcast %cst_55 : f32 to vector<8x1xf32>
    %132 = arith.addf %130, %131 : vector<8x1xf32>
    %133 = math.rsqrt %132 : vector<8x1xf32>
    %134 = vector.broadcast %133 : vector<8x1xf32> to vector<8x32xf32>
    %135 = arith.mulf %125, %134 : vector<8x32xf32>
    %136 = vector.broadcast %22 : vector<1x32xf32> to vector<8x32xf32>
    %137 = arith.mulf %135, %136 : vector<8x32xf32>
    %cst_56 = arith.constant dense<0.000000e+00> : vector<8x128xf32>
    %138 = tpu.matmul %137, %16, %cst_56 {dimension_numbers = #tpu.dot_dimension_numbers<[1], [0], [0], [1], [0, 0, 1, 1], [], []>} : vector<8x32xf32>, vector<32x128xf32>, vector<8x128xf32> -> vector<8x128xf32>
    %139 = vector.extract_strided_slice %138 {offsets = [0, 0], sizes = [8, 64], strides = [1, 1]} : vector<8x128xf32> to vector<8x64xf32>
    %140 = vector.extract_strided_slice %138 {offsets = [0, 64], sizes = [8, 64], strides = [1, 1]} : vector<8x128xf32> to vector<8x64xf32>
    %141 = arith.negf %139 : vector<8x64xf32>
    %142 = math.exp %141 : vector<8x64xf32>
    %cst_57 = arith.constant 1.000000e+00 : f32
    %143 = vector.broadcast %cst_57 : f32 to vector<8x64xf32>
    %144 = arith.addf %143, %142 : vector<8x64xf32>
    %145 = arith.divf %143, %144 : vector<8x64xf32>
    %146 = arith.mulf %139, %145 : vector<8x64xf32>
    %147 = arith.mulf %146, %140 : vector<8x64xf32>
    %cst_58 = arith.constant dense<0.000000e+00> : vector<8x32xf32>
    %148 = tpu.matmul %147, %18, %cst_58 {dimension_numbers = #tpu.dot_dimension_numbers<[1], [0], [0], [1], [0, 0, 1, 1], [], []>} : vector<8x64xf32>, vector<64x32xf32>, vector<8x32xf32> -> vector<8x32xf32>
    %149 = arith.addf %125, %148 : vector<8x32xf32>
    %c1 = arith.constant 1 : index
    %c0_59 = arith.constant 0 : index
    %c0_60 = arith.constant 0 : index
    %150 = vector.load %arg4[%c1, %c0_59, %c0_60] : memref<2x32x160xf32, #tpu.memory_space<vmem>>, vector<1x32x160xf32>
    %151 = vector.shape_cast %150 : vector<1x32x160xf32> to vector<32x160xf32>
    %c1_61 = arith.constant 1 : index
    %c0_62 = arith.constant 0 : index
    %c0_63 = arith.constant 0 : index
    %152 = vector.load %arg5[%c1_61, %c0_62, %c0_63] : memref<2x32x32xf32, #tpu.memory_space<vmem>>, vector<1x32x32xf32>
    %153 = vector.shape_cast %152 : vector<1x32x32xf32> to vector<32x32xf32>
    %c1_64 = arith.constant 1 : index
    %c0_65 = arith.constant 0 : index
    %c0_66 = arith.constant 0 : index
    %154 = vector.load %arg6[%c1_64, %c0_65, %c0_66] : memref<2x32x128xf32, #tpu.memory_space<vmem>>, vector<1x32x128xf32>
    %155 = vector.shape_cast %154 : vector<1x32x128xf32> to vector<32x128xf32>
    %c1_67 = arith.constant 1 : index
    %c0_68 = arith.constant 0 : index
    %c0_69 = arith.constant 0 : index
    %156 = vector.load %arg7[%c1_67, %c0_68, %c0_69] : memref<2x64x32xf32, #tpu.memory_space<vmem>>, vector<1x64x32xf32>
    %157 = vector.shape_cast %156 : vector<1x64x32xf32> to vector<64x32xf32>
    %c1_70 = arith.constant 1 : index
    %c0_71 = arith.constant 0 : index
    %c0_72 = arith.constant 0 : index
    %158 = vector.load %arg8[%c1_70, %c0_71, %c0_72] : memref<2x1x32xf32, #tpu.memory_space<vmem>>, vector<1x1x32xf32>
    %159 = vector.shape_cast %158 : vector<1x1x32xf32> to vector<1x32xf32>
    %c1_73 = arith.constant 1 : index
    %c0_74 = arith.constant 0 : index
    %c0_75 = arith.constant 0 : index
    %160 = vector.load %arg9[%c1_73, %c0_74, %c0_75] : memref<2x1x32xf32, #tpu.memory_space<vmem>>, vector<1x1x32xf32>
    %161 = vector.shape_cast %160 : vector<1x1x32xf32> to vector<1x32xf32>
    %162 = arith.mulf %149, %149 : vector<8x32xf32>
    %cst_76 = arith.constant dense<0.000000e+00> : vector<8xf32>
    %163 = vector.multi_reduction <add>, %162, %cst_76 [1] : vector<8x32xf32> to vector<8xf32>
    %164 = vector.shape_cast %163 : vector<8xf32> to vector<8x1xf32>
    %cst_77 = arith.constant 3.200000e+01 : f32
    %165 = vector.broadcast %cst_77 : f32 to vector<8x1xf32>
    %166 = arith.divf %164, %165 : vector<8x1xf32>
    %cst_78 = arith.constant 9.99999997E-7 : f32
    %167 = vector.broadcast %cst_78 : f32 to vector<8x1xf32>
    %168 = arith.addf %166, %167 : vector<8x1xf32>
    %169 = math.rsqrt %168 : vector<8x1xf32>
    %170 = vector.broadcast %169 : vector<8x1xf32> to vector<8x32xf32>
    %171 = arith.mulf %149, %170 : vector<8x32xf32>
    %172 = vector.broadcast %159 : vector<1x32xf32> to vector<8x32xf32>
    %173 = arith.mulf %171, %172 : vector<8x32xf32>
    %cst_79 = arith.constant dense<0.000000e+00> : vector<8x160xf32>
    %174 = tpu.matmul %173, %151, %cst_79 {dimension_numbers = #tpu.dot_dimension_numbers<[1], [0], [0], [1], [0, 0, 1, 1], [], []>} : vector<8x32xf32>, vector<32x160xf32>, vector<8x160xf32> -> vector<8x160xf32>
    %175 = vector.extract_strided_slice %174 {offsets = [0, 0], sizes = [8, 32], strides = [1, 1]} : vector<8x160xf32> to vector<8x32xf32>
    %176 = arith.mulf %175, %9 : vector<8x32xf32>
    %177 = vector.extract_strided_slice %174 {offsets = [0, 96], sizes = [8, 32], strides = [1, 1]} : vector<8x160xf32> to vector<8x32xf32>
    %178 = arith.mulf %177, %10 : vector<8x32xf32>
    %179 = arith.addf %176, %178 : vector<8x32xf32>
    %180 = vector.extract_strided_slice %174 {offsets = [0, 32], sizes = [8, 32], strides = [1, 1]} : vector<8x160xf32> to vector<8x32xf32>
    %181 = arith.mulf %180, %9 : vector<8x32xf32>
    %182 = vector.extract_strided_slice %174 {offsets = [0, 128], sizes = [8, 32], strides = [1, 1]} : vector<8x160xf32> to vector<8x32xf32>
    %183 = arith.mulf %182, %10 : vector<8x32xf32>
    %184 = arith.addf %181, %183 : vector<8x32xf32>
    %185 = vector.extract_strided_slice %174 {offsets = [0, 64], sizes = [8, 32], strides = [1, 1]} : vector<8x160xf32> to vector<8x32xf32>
    %186 = vector.extract_strided_slice %179 {offsets = [0, 0], sizes = [8, 8], strides = [1, 1]} : vector<8x32xf32> to vector<8x8xf32>
    %cst_80 = arith.constant 0.353553385 : f32
    %187 = vector.broadcast %cst_80 : f32 to vector<8x8xf32>
    %188 = arith.mulf %186, %187 : vector<8x8xf32>
    %189 = vector.extract_strided_slice %184 {offsets = [0, 0], sizes = [8, 8], strides = [1, 1]} : vector<8x32xf32> to vector<8x8xf32>
    %190 = vector.extract_strided_slice %185 {offsets = [0, 0], sizes = [8, 8], strides = [1, 1]} : vector<8x32xf32> to vector<8x8xf32>
    %191 = tpu.transpose %189, [1, 0] : vector<8x8xf32> -> vector<8x8xf32>
    %cst_81 = arith.constant dense<0.000000e+00> : vector<8x8xf32>
    %192 = tpu.matmul %188, %191, %cst_81 {dimension_numbers = #tpu.dot_dimension_numbers<[1], [0], [0], [1], [0, 0, 1, 1], [], []>} : vector<8x8xf32>, vector<8x8xf32>, vector<8x8xf32> -> vector<8x8xf32>
    %193 = arith.addf %192, %5 : vector<8x8xf32>
    %cst_82 = arith.constant dense<0xFF800000> : vector<8xf32>
    %194 = vector.multi_reduction <maximumf>, %193, %cst_82 [1] : vector<8x8xf32> to vector<8xf32>
    %195 = vector.shape_cast %194 : vector<8xf32> to vector<8x1xf32>
    %196 = vector.broadcast %195 : vector<8x1xf32> to vector<8x8xf32>
    %197 = arith.subf %193, %196 : vector<8x8xf32>
    %198 = math.exp %197 : vector<8x8xf32>
    %cst_83 = arith.constant dense<0.000000e+00> : vector<8xf32>
    %199 = vector.multi_reduction <add>, %198, %cst_83 [1] : vector<8x8xf32> to vector<8xf32>
    %200 = vector.shape_cast %199 : vector<8xf32> to vector<8x1xf32>
    %cst_84 = arith.constant dense<0.000000e+00> : vector<8x8xf32>
    %201 = tpu.matmul %198, %190, %cst_84 {dimension_numbers = #tpu.dot_dimension_numbers<[1], [0], [0], [1], [0, 0, 1, 1], [], []>} : vector<8x8xf32>, vector<8x8xf32>, vector<8x8xf32> -> vector<8x8xf32>
    %202 = tpu.reciprocal %200 {approx = true} : vector<8x1xf32> -> vector<8x1xf32>
    %203 = vector.broadcast %202 : vector<8x1xf32> to vector<8x8xf32>
    %204 = arith.mulf %201, %203 : vector<8x8xf32>
    %205 = vector.extract_strided_slice %179 {offsets = [0, 8], sizes = [8, 8], strides = [1, 1]} : vector<8x32xf32> to vector<8x8xf32>
    %cst_85 = arith.constant 0.353553385 : f32
    %206 = vector.broadcast %cst_85 : f32 to vector<8x8xf32>
    %207 = arith.mulf %205, %206 : vector<8x8xf32>
    %208 = vector.extract_strided_slice %184 {offsets = [0, 8], sizes = [8, 8], strides = [1, 1]} : vector<8x32xf32> to vector<8x8xf32>
    %209 = vector.extract_strided_slice %185 {offsets = [0, 8], sizes = [8, 8], strides = [1, 1]} : vector<8x32xf32> to vector<8x8xf32>
    %210 = tpu.transpose %208, [1, 0] : vector<8x8xf32> -> vector<8x8xf32>
    %cst_86 = arith.constant dense<0.000000e+00> : vector<8x8xf32>
    %211 = tpu.matmul %207, %210, %cst_86 {dimension_numbers = #tpu.dot_dimension_numbers<[1], [0], [0], [1], [0, 0, 1, 1], [], []>} : vector<8x8xf32>, vector<8x8xf32>, vector<8x8xf32> -> vector<8x8xf32>
    %212 = arith.addf %211, %5 : vector<8x8xf32>
    %cst_87 = arith.constant dense<0xFF800000> : vector<8xf32>
    %213 = vector.multi_reduction <maximumf>, %212, %cst_87 [1] : vector<8x8xf32> to vector<8xf32>
    %214 = vector.shape_cast %213 : vector<8xf32> to vector<8x1xf32>
    %215 = vector.broadcast %214 : vector<8x1xf32> to vector<8x8xf32>
    %216 = arith.subf %212, %215 : vector<8x8xf32>
    %217 = math.exp %216 : vector<8x8xf32>
    %cst_88 = arith.constant dense<0.000000e+00> : vector<8xf32>
    %218 = vector.multi_reduction <add>, %217, %cst_88 [1] : vector<8x8xf32> to vector<8xf32>
    %219 = vector.shape_cast %218 : vector<8xf32> to vector<8x1xf32>
    %cst_89 = arith.constant dense<0.000000e+00> : vector<8x8xf32>
    %220 = tpu.matmul %217, %209, %cst_89 {dimension_numbers = #tpu.dot_dimension_numbers<[1], [0], [0], [1], [0, 0, 1, 1], [], []>} : vector<8x8xf32>, vector<8x8xf32>, vector<8x8xf32> -> vector<8x8xf32>
    %221 = tpu.reciprocal %219 {approx = true} : vector<8x1xf32> -> vector<8x1xf32>
    %222 = vector.broadcast %221 : vector<8x1xf32> to vector<8x8xf32>
    %223 = arith.mulf %220, %222 : vector<8x8xf32>
    %224 = vector.extract_strided_slice %179 {offsets = [0, 16], sizes = [8, 8], strides = [1, 1]} : vector<8x32xf32> to vector<8x8xf32>
    %cst_90 = arith.constant 0.353553385 : f32
    %225 = vector.broadcast %cst_90 : f32 to vector<8x8xf32>
    %226 = arith.mulf %224, %225 : vector<8x8xf32>
    %227 = vector.extract_strided_slice %184 {offsets = [0, 16], sizes = [8, 8], strides = [1, 1]} : vector<8x32xf32> to vector<8x8xf32>
    %228 = vector.extract_strided_slice %185 {offsets = [0, 16], sizes = [8, 8], strides = [1, 1]} : vector<8x32xf32> to vector<8x8xf32>
    %229 = tpu.transpose %227, [1, 0] : vector<8x8xf32> -> vector<8x8xf32>
    %cst_91 = arith.constant dense<0.000000e+00> : vector<8x8xf32>
    %230 = tpu.matmul %226, %229, %cst_91 {dimension_numbers = #tpu.dot_dimension_numbers<[1], [0], [0], [1], [0, 0, 1, 1], [], []>} : vector<8x8xf32>, vector<8x8xf32>, vector<8x8xf32> -> vector<8x8xf32>
    %231 = arith.addf %230, %5 : vector<8x8xf32>
    %cst_92 = arith.constant dense<0xFF800000> : vector<8xf32>
    %232 = vector.multi_reduction <maximumf>, %231, %cst_92 [1] : vector<8x8xf32> to vector<8xf32>
    %233 = vector.shape_cast %232 : vector<8xf32> to vector<8x1xf32>
    %234 = vector.broadcast %233 : vector<8x1xf32> to vector<8x8xf32>
    %235 = arith.subf %231, %234 : vector<8x8xf32>
    %236 = math.exp %235 : vector<8x8xf32>
    %cst_93 = arith.constant dense<0.000000e+00> : vector<8xf32>
    %237 = vector.multi_reduction <add>, %236, %cst_93 [1] : vector<8x8xf32> to vector<8xf32>
    %238 = vector.shape_cast %237 : vector<8xf32> to vector<8x1xf32>
    %cst_94 = arith.constant dense<0.000000e+00> : vector<8x8xf32>
    %239 = tpu.matmul %236, %228, %cst_94 {dimension_numbers = #tpu.dot_dimension_numbers<[1], [0], [0], [1], [0, 0, 1, 1], [], []>} : vector<8x8xf32>, vector<8x8xf32>, vector<8x8xf32> -> vector<8x8xf32>
    %240 = tpu.reciprocal %238 {approx = true} : vector<8x1xf32> -> vector<8x1xf32>
    %241 = vector.broadcast %240 : vector<8x1xf32> to vector<8x8xf32>
    %242 = arith.mulf %239, %241 : vector<8x8xf32>
    %243 = vector.extract_strided_slice %179 {offsets = [0, 24], sizes = [8, 8], strides = [1, 1]} : vector<8x32xf32> to vector<8x8xf32>
    %cst_95 = arith.constant 0.353553385 : f32
    %244 = vector.broadcast %cst_95 : f32 to vector<8x8xf32>
    %245 = arith.mulf %243, %244 : vector<8x8xf32>
    %246 = vector.extract_strided_slice %184 {offsets = [0, 24], sizes = [8, 8], strides = [1, 1]} : vector<8x32xf32> to vector<8x8xf32>
    %247 = vector.extract_strided_slice %185 {offsets = [0, 24], sizes = [8, 8], strides = [1, 1]} : vector<8x32xf32> to vector<8x8xf32>
    %248 = tpu.transpose %246, [1, 0] : vector<8x8xf32> -> vector<8x8xf32>
    %cst_96 = arith.constant dense<0.000000e+00> : vector<8x8xf32>
    %249 = tpu.matmul %245, %248, %cst_96 {dimension_numbers = #tpu.dot_dimension_numbers<[1], [0], [0], [1], [0, 0, 1, 1], [], []>} : vector<8x8xf32>, vector<8x8xf32>, vector<8x8xf32> -> vector<8x8xf32>
    %250 = arith.addf %249, %5 : vector<8x8xf32>
    %cst_97 = arith.constant dense<0xFF800000> : vector<8xf32>
    %251 = vector.multi_reduction <maximumf>, %250, %cst_97 [1] : vector<8x8xf32> to vector<8xf32>
    %252 = vector.shape_cast %251 : vector<8xf32> to vector<8x1xf32>
    %253 = vector.broadcast %252 : vector<8x1xf32> to vector<8x8xf32>
    %254 = arith.subf %250, %253 : vector<8x8xf32>
    %255 = math.exp %254 : vector<8x8xf32>
    %cst_98 = arith.constant dense<0.000000e+00> : vector<8xf32>
    %256 = vector.multi_reduction <add>, %255, %cst_98 [1] : vector<8x8xf32> to vector<8xf32>
    %257 = vector.shape_cast %256 : vector<8xf32> to vector<8x1xf32>
    %cst_99 = arith.constant dense<0.000000e+00> : vector<8x8xf32>
    %258 = tpu.matmul %255, %247, %cst_99 {dimension_numbers = #tpu.dot_dimension_numbers<[1], [0], [0], [1], [0, 0, 1, 1], [], []>} : vector<8x8xf32>, vector<8x8xf32>, vector<8x8xf32> -> vector<8x8xf32>
    %259 = tpu.reciprocal %257 {approx = true} : vector<8x1xf32> -> vector<8x1xf32>
    %260 = vector.broadcast %259 : vector<8x1xf32> to vector<8x8xf32>
    %261 = arith.mulf %258, %260 : vector<8x8xf32>
    %262 = tpu.concatenate %204, %223, %242, %261 in 1 : vector<8x8xf32>, vector<8x8xf32>, vector<8x8xf32>, vector<8x8xf32> -> vector<8x32xf32>
    %cst_100 = arith.constant dense<0.000000e+00> : vector<8x32xf32>
    %263 = tpu.matmul %262, %153, %cst_100 {dimension_numbers = #tpu.dot_dimension_numbers<[1], [0], [0], [1], [0, 0, 1, 1], [], []>} : vector<8x32xf32>, vector<32x32xf32>, vector<8x32xf32> -> vector<8x32xf32>
    %264 = arith.addf %149, %263 : vector<8x32xf32>
    %265 = arith.mulf %264, %264 : vector<8x32xf32>
    %cst_101 = arith.constant dense<0.000000e+00> : vector<8xf32>
    %266 = vector.multi_reduction <add>, %265, %cst_101 [1] : vector<8x32xf32> to vector<8xf32>
    %267 = vector.shape_cast %266 : vector<8xf32> to vector<8x1xf32>
    %cst_102 = arith.constant 3.200000e+01 : f32
    %268 = vector.broadcast %cst_102 : f32 to vector<8x1xf32>
    %269 = arith.divf %267, %268 : vector<8x1xf32>
    %cst_103 = arith.constant 9.99999997E-7 : f32
    %270 = vector.broadcast %cst_103 : f32 to vector<8x1xf32>
    %271 = arith.addf %269, %270 : vector<8x1xf32>
    %272 = math.rsqrt %271 : vector<8x1xf32>
    %273 = vector.broadcast %272 : vector<8x1xf32> to vector<8x32xf32>
    %274 = arith.mulf %264, %273 : vector<8x32xf32>
    %275 = vector.broadcast %161 : vector<1x32xf32> to vector<8x32xf32>
    %276 = arith.mulf %274, %275 : vector<8x32xf32>
    %cst_104 = arith.constant dense<0.000000e+00> : vector<8x128xf32>
    %277 = tpu.matmul %276, %155, %cst_104 {dimension_numbers = #tpu.dot_dimension_numbers<[1], [0], [0], [1], [0, 0, 1, 1], [], []>} : vector<8x32xf32>, vector<32x128xf32>, vector<8x128xf32> -> vector<8x128xf32>
    %278 = vector.extract_strided_slice %277 {offsets = [0, 0], sizes = [8, 64], strides = [1, 1]} : vector<8x128xf32> to vector<8x64xf32>
    %279 = vector.extract_strided_slice %277 {offsets = [0, 64], sizes = [8, 64], strides = [1, 1]} : vector<8x128xf32> to vector<8x64xf32>
    %280 = arith.negf %278 : vector<8x64xf32>
    %281 = math.exp %280 : vector<8x64xf32>
    %cst_105 = arith.constant 1.000000e+00 : f32
    %282 = vector.broadcast %cst_105 : f32 to vector<8x64xf32>
    %283 = arith.addf %282, %281 : vector<8x64xf32>
    %284 = arith.divf %282, %283 : vector<8x64xf32>
    %285 = arith.mulf %278, %284 : vector<8x64xf32>
    %286 = arith.mulf %285, %279 : vector<8x64xf32>
    %cst_106 = arith.constant dense<0.000000e+00> : vector<8x32xf32>
    %287 = tpu.matmul %286, %157, %cst_106 {dimension_numbers = #tpu.dot_dimension_numbers<[1], [0], [0], [1], [0, 0, 1, 1], [], []>} : vector<8x64xf32>, vector<64x32xf32>, vector<8x32xf32> -> vector<8x32xf32>
    %288 = arith.addf %264, %287 : vector<8x32xf32>
    %289 = tpu.concatenate %45, %46, %184, %185 in 1 : vector<8x32xf32>, vector<8x32xf32>, vector<8x32xf32>, vector<8x32xf32> -> vector<8x128xf32>
    %c0_107 = arith.constant 0 : index
    %c0_108 = arith.constant 0 : index
    %290 = vector.load %arg13[%c0_107, %c0_108] : memref<8x128xf32, #tpu.memory_space<vmem>>, vector<8x128xf32>
    tpu.vector_store %arg13[%c0_107, %c0_108], %289 {strides = array<i32>} : memref<8x128xf32, #tpu.memory_space<vmem>>, vector<8x128xf32>,
    %291 = arith.mulf %288, %288 : vector<8x32xf32>
    %cst_109 = arith.constant dense<0.000000e+00> : vector<8xf32>
    %292 = vector.multi_reduction <add>, %291, %cst_109 [1] : vector<8x32xf32> to vector<8xf32>
    %293 = vector.shape_cast %292 : vector<8xf32> to vector<8x1xf32>
    %cst_110 = arith.constant 3.200000e+01 : f32
    %294 = vector.broadcast %cst_110 : f32 to vector<8x1xf32>
    %295 = arith.divf %293, %294 : vector<8x1xf32>
    %cst_111 = arith.constant 9.99999997E-7 : f32
    %296 = vector.broadcast %cst_111 : f32 to vector<8x1xf32>
    %297 = arith.addf %295, %296 : vector<8x1xf32>
    %298 = math.rsqrt %297 : vector<8x1xf32>
    %299 = vector.broadcast %298 : vector<8x1xf32> to vector<8x32xf32>
    %300 = arith.mulf %288, %299 : vector<8x32xf32>
    %301 = vector.broadcast %6 : vector<1x32xf32> to vector<8x32xf32>
    %302 = arith.mulf %300, %301 : vector<8x32xf32>
    %cst_112 = arith.constant dense<0.000000e+00> : vector<8x128xf32>
    %303 = tpu.matmul %302, %7, %cst_112 {dimension_numbers = #tpu.dot_dimension_numbers<[1], [0], [0], [1], [0, 0, 1, 1], [], []>} : vector<8x32xf32>, vector<32x128xf32>, vector<8x128xf32> -> vector<8x128xf32>
    %c0_113 = arith.constant 0 : index
    %c0_114 = arith.constant 0 : index
    %304 = vector.load %arg12[%c0_113, %c0_114] : memref<8x128xf32, #tpu.memory_space<vmem>>, vector<8x128xf32>
    tpu.vector_store %arg12[%c0_113, %c0_114], %303 {strides = array<i32>} : memref<8x128xf32, #tpu.memory_space<vmem>>, vector<8x128xf32>,
    return
  }
}

</mosaic_0001>

<llo_original>
// kernel: tile.19
$region0: #{tile.19}
  %s0 = inlined_call_operand.vmem [shape: f32[8,4,8], index: 0, kind: input, shape index: {}]
  %s1 = inlined_call_operand.vmem [shape: f32[8,32], index: 1, kind: output, shape index: {}]
  $region1: #{tile.19} parent=0
    #allocation0 [shape = 'u8[32768]{0}', space=vmem, size = 0x8000, scoped, tag = 'scoped mem for input reshape']
    %s3 = ssub.s32 16, 1
    %s4 = scalar_lea.vmem %s0, 28
    %v5 = vld [vmem:[%s4] sm:%s3]
    %s6 = scalar_lea.vmem [#allocation0], 56
    %7 = vst [vmem:[%s6] sm:%s3] %v5
    %s8 = scalar_lea.vmem %s0, 24
    %v9 = vld [vmem:[%s8] sm:%s3]
    %s10 = scalar_lea.vmem [#allocation0], 48
    %11 = vst [vmem:[%s10] sm:%s3] %v9
    %s12 = scalar_lea.vmem %s0, 20
    %v13 = vld [vmem:[%s12] sm:%s3]
    %s14 = scalar_lea.vmem [#allocation0], 40
    %15 = vst [vmem:[%s14] sm:%s3] %v13
    %s16 = scalar_lea.vmem %s0, 16
    %v17 = vld [vmem:[%s16] sm:%s3]
    %s18 = scalar_lea.vmem [#allocation0], 32
    %19 = vst [vmem:[%s18] sm:%s3] %v17
    %s20 = scalar_lea.vmem %s0, 12
    %v21 = vld [vmem:[%s20] sm:%s3]
    %s22 = scalar_lea.vmem [#allocation0], 24
    %23 = vst [vmem:[%s22] sm:%s3] %v21
    %s24 = scalar_lea.vmem %s0, 8
    %v25 = vld [vmem:[%s24] sm:%s3]
    %s26 = scalar_lea.vmem [#allocation0], 16
    %27 = vst [vmem:[%s26] sm:%s3] %v25
    %s28 = scalar_lea.vmem %s0, 4
    %v29 = vld [vmem:[%s28] sm:%s3]
    %s30 = scalar_lea.vmem [#allocation0], 8
    %31 = vst [vmem:[%s30] sm:%s3] %v29
    %v32 = vld [vmem:[%s0] sm:%s3]
    %33 = vst [vmem:[#allocation0] sm:%s3] %v32
    %v34 = vld [vmem:[#allocation0] ss:$8 sm:$0xf]
    %v35 = vld [vmem:[#allocation0] ss:$8 sm:$0xf0]
    %vm36 = vcmask 1047556
    %v37 = vsel %vm36, %v35, %v34
    %vm38 = vcmask 64512
    %39 = vst.msk [vmem:[%s1] sm:$0xff] %vm38, %v37
    %s40 = scalar_lea.vmem [#allocation0], 3
    %v41 = vld [vmem:[%s40] ss:$8 sm:$0xf]
    %s42 = scalar_lea.vmem [#allocation0], 3
    %v43 = vld [vmem:[%s42] ss:$8 sm:$0xf0]
    %vm44 = vcmask 1047556
    %v45 = vsel %vm44, %v43, %v41
    %46 = vrot.lane.b32.xlu0 %v45, 24
    %v47 = vpop.permute.xlu0 %46
    %vm48 = vcmask 261312
    %49 = vst.msk [vmem:[%s1] sm:$0xff] %vm48, %v47
    %s50 = scalar_lea.vmem [#allocation0], 2
    %v51 = vld [vmem:[%s50] ss:$8 sm:$0xf]
    %s52 = scalar_lea.vmem [#allocation0], 2
    %v53 = vld [vmem:[%s52] ss:$8 sm:$0xf0]
    %vm54 = vcmask 1047556
    %v55 = vsel %vm54, %v53, %v51
    %56 = vrot.lane.b32.xlu0 %v55, 16
    %v57 = vpop.permute.xlu0 %56
    %vm58 = vcmask 195712
    %59 = vst.msk [vmem:[%s1] sm:$0xff] %vm58, %v57
    %s60 = scalar_lea.vmem [#allocation0], 1
    %v61 = vld [vmem:[%s60] ss:$8 sm:$0xf]
    %s62 = scalar_lea.vmem [#allocation0], 1
    %v63 = vld [vmem:[%s62] ss:$8 sm:$0xf0]
    %vm64 = vcmask 1047556
    %v65 = vsel %vm64, %v63, %v61
    %66 = vrot.lane.b32.xlu0 %v65, 8
    %v67 = vpop.permute.xlu0 %66
    %vm68 = vcmask 130112
    %69 = vst.msk [vmem:[%s1] sm:$0xff] %vm68, %v67

// kernel: first_vicuna_forward.1
$region0: #{first_vicuna_forward.1}
  #allocation0 [shape = 'u32[]', space=smem, size = 0x4, offset = 0x4, fixed_abs, tag = 'smem constant byte address 0x4 - core index']
  #allocation1 [shape = 'u32[72,128]{1,0:T(1,128)}', space=vmem, size = 0x9000, scoped, tag = 'internal scratch']
  %s0 = inlined_call_operand.vmem [shape: f32[8,32], index: 0, kind: input, shape index: {}]
  %s1 = inlined_call_operand.vmem [shape: f32[8,32], index: 1, kind: input, shape index: {}]
  %s2 = inlined_call_operand.vmem [shape: f32[8,32], index: 2, kind: input, shape index: {}]
  %s3 = inlined_call_operand.vmem [shape: f32[8,128], index: 3, kind: input, shape index: {}, may-alias: {3,13}]
  %s4 = inlined_call_operand.vmem [shape: f32[2,32,160], index: 4, kind: input, shape index: {}]
  %s5 = inlined_call_operand.vmem [shape: f32[2,32,32], index: 5, kind: input, shape index: {}]
  %s6 = inlined_call_operand.vmem [shape: f32[2,32,128], index: 6, kind: input, shape index: {}]
  %s7 = inlined_call_operand.vmem [shape: f32[2,64,32], index: 7, kind: input, shape index: {}]
  %s8 = inlined_call_operand.vmem [shape: f32[2,1,32], index: 8, kind: input, shape index: {}]
  %s9 = inlined_call_operand.vmem [shape: f32[2,1,32], index: 9, kind: input, shape index: {}]
  %s10 = inlined_call_operand.vmem [shape: f32[1,32], index: 10, kind: input, shape index: {}]
  %s11 = inlined_call_operand.vmem [shape: f32[32,128], index: 11, kind: input, shape index: {}]
  %s12 = inlined_call_operand.hbm [shape: f32[8,128], index: 12, kind: output, shape index: {0}]
  %s13 = inlined_call_operand.vmem [shape: f32[8,128], index: 13, kind: output, shape index: {1}, may-alias: {3,13}]
  %14 = xla_tuple %s12, %s13
  %s15 = sld [smem:[#allocation0]]
  $region66: #{first_vicuna_forward.1} parent=0
    _
  %s17 = ssub.s32 1, %s15
  %s18 = scalar_select 0, %s17, %s15
  $region1: #{first_vicuna_forward.1} parent=0
    #allocation2 [shape = 'u8[4096]{0}', space=vmem, size = 0x1000, scoped, tag = 'output window, operand 0, single buffered']
    #allocation3 [shape = 's32[1]{0}', space=sflag, size = 0x4, scoped, tag = 'scoped memory for first_vicuna_forward.1']
    %19 = vsyncpa [#allocation3], 0
    // Predicated region
    $region2: #{first_vicuna_forward.1} parent=1 // pred_check
      _
    $region3: #{first_vicuna_forward.1} parent=1 // pred_check_branch
      %21 = sbr.rel (0) target = $region5
    $region4: #{first_vicuna_forward.1} parent=1 // pred_region
      _
    $region5: #{first_vicuna_forward.1} parent=1 // pred_fallthru
      _
    // Predicated region
    $region6: #{first_vicuna_forward.1} parent=1 // pred_check
      _
    $region7: #{first_vicuna_forward.1} parent=1 // pred_check_branch
      %23 = sbr.rel (0) target = $region9
    $region8: #{first_vicuna_forward.1} parent=1 // pred_region
      _
    $region9: #{first_vicuna_forward.1} parent=1 // pred_fallthru
      _
    // Predicated region
    $region10: #{first_vicuna_forward.1} parent=1 // pred_check
      _
    $region11: #{first_vicuna_forward.1} parent=1 // pred_check_branch
      %25 = sbr.rel (0) target = $region13
    $region12: #{first_vicuna_forward.1} parent=1 // pred_region
      _
    $region13: #{first_vicuna_forward.1} parent=1 // pred_fallthru
      _
    // Predicated region
    $region14: #{first_vicuna_forward.1} parent=1 // pred_check
      _
    $region15: #{first_vicuna_forward.1} parent=1 // pred_check_branch
      %27 = sbr.rel (0) target = $region17
    $region16: #{first_vicuna_forward.1} parent=1 // pred_region
      _
    $region17: #{first_vicuna_forward.1} parent=1 // pred_fallthru
      _
    // Predicated region
    $region18: #{first_vicuna_forward.1} parent=1 // pred_check
      _
    $region19: #{first_vicuna_forward.1} parent=1 // pred_check_branch
      %29 = sbr.rel (0) target = $region21
    $region20: #{first_vicuna_forward.1} parent=1 // pred_region
      _
    $region21: #{first_vicuna_forward.1} parent=1 // pred_fallthru
      _
    // Predicated region
    $region22: #{first_vicuna_forward.1} parent=1 // pred_check
      _
    $region23: #{first_vicuna_forward.1} parent=1 // pred_check_branch
      %31 = sbr.rel (0) target = $region25
    $region24: #{first_vicuna_forward.1} parent=1 // pred_region
      _
    $region25: #{first_vicuna_forward.1} parent=1 // pred_fallthru
      _
    // Predicated region
    $region26: #{first_vicuna_forward.1} parent=1 // pred_check
      _
    $region27: #{first_vicuna_forward.1} parent=1 // pred_check_branch
      %33 = sbr.rel (0) target = $region29
    $region28: #{first_vicuna_forward.1} parent=1 // pred_region
      _
    $region29: #{first_vicuna_forward.1} parent=1 // pred_fallthru
      _
    // Predicated region
    $region30: #{first_vicuna_forward.1} parent=1 // pred_check
      _
    $region31: #{first_vicuna_forward.1} parent=1 // pred_check_branch
      %35 = sbr.rel (0) target = $region33
    $region32: #{first_vicuna_forward.1} parent=1 // pred_region
      _
    $region33: #{first_vicuna_forward.1} parent=1 // pred_fallthru
      _
    // Predicated region
    $region34: #{first_vicuna_forward.1} parent=1 // pred_check
      _
    $region35: #{first_vicuna_forward.1} parent=1 // pred_check_branch
      %37 = sbr.rel (0) target = $region37
    $region36: #{first_vicuna_forward.1} parent=1 // pred_region
      _
    $region37: #{first_vicuna_forward.1} parent=1 // pred_fallthru
      _
    // Predicated region
    $region38: #{first_vicuna_forward.1} parent=1 // pred_check
      _
    $region39: #{first_vicuna_forward.1} parent=1 // pred_check_branch
      %39 = sbr.rel (0) target = $region41
    $region40: #{first_vicuna_forward.1} parent=1 // pred_region
      _
    $region41: #{first_vicuna_forward.1} parent=1 // pred_fallthru
      _
    // Predicated region
    $region42: #{first_vicuna_forward.1} parent=1 // pred_check
      _
    $region43: #{first_vicuna_forward.1} parent=1 // pred_check_branch
      %41 = sbr.rel (0) target = $region45
    $region44: #{first_vicuna_forward.1} parent=1 // pred_region
      _
    $region45: #{first_vicuna_forward.1} parent=1 // pred_fallthru
      _
    // Predicated region
    $region46: #{first_vicuna_forward.1} parent=1 // pred_check
      _
    $region47: #{first_vicuna_forward.1} parent=1 // pred_check_branch
      %43 = sbr.rel (0) target = $region49
    $region48: #{first_vicuna_forward.1} parent=1 // pred_region
      _
    $region49: #{first_vicuna_forward.1} parent=1 // pred_fallthru
      _
    %v44 = vlaneseq
    %v45 = vshrl.u32 %v44, 7
    %v46 = vlaneseq
    %v47 = vand.u32 %v46, 127
    %vm48 = vcmp.le.s32.totalorder %v47, %v45
    %v49 = vsel %vm48, 0.0, -1e+09
    %v50 = vld [vmem:[%s10] sm:$0x1]
    %v51 = vld [vmem:[%s11] sm:$0xff]
    %v52 = vld [vmem:[%s11 + $0x8] sm:$0xff]
    %v53 = vld [vmem:[%s11 + $0x10] sm:$0xff]
    %v54 = vld [vmem:[%s11 + $0x18] sm:$0xff]
    %v55 = vld [vmem:[%s0] sm:$0xff]
    %v56 = vld [vmem:[%s1] sm:$0xff]
    %v57 = vld [vmem:[%s2] sm:$0xff]
    %v58 = vld [vmem:[%s4] sm:$0xff]
    %v59 = vld [vmem:[%s4 + $0x8] sm:$0xff]
    %v60 = vld [vmem:[%s4 + $0x10] sm:$0xff]
    %v61 = vld [vmem:[%s4 + $0x18] sm:$0xff]
    %v62 = vld [vmem:[%s4 + $0x20] sm:$0xff]
    %v63 = vld [vmem:[%s4 + $0x28] sm:$0xff]
    %v64 = vld [vmem:[%s4 + $0x30] sm:$0xff]
    %v65 = vld [vmem:[%s4 + $0x38] sm:$0xff]
    %v66 = vld [vmem:[%s5] sm:$0xff]
    %v67 = vld [vmem:[%s5 + $0x8] sm:$0xff]
    %v68 = vld [vmem:[%s5 + $0x10] sm:$0xff]
    %v69 = vld [vmem:[%s5 + $0x18] sm:$0xff]
    %v70 = vld [vmem:[%s6] sm:$0xff]
    %v71 = vld [vmem:[%s6 + $0x8] sm:$0xff]
    %v72 = vld [vmem:[%s6 + $0x10] sm:$0xff]
    %v73 = vld [vmem:[%s6 + $0x18] sm:$0xff]
    %v74 = vld [vmem:[%s7] sm:$0xff]
    %v75 = vld [vmem:[%s7 + $0x8] sm:$0xff]
    %v76 = vld [vmem:[%s7 + $0x10] sm:$0xff]
    %v77 = vld [vmem:[%s7 + $0x18] sm:$0xff]
    %v78 = vld [vmem:[%s7 + $0x20] sm:$0xff]
    %v79 = vld [vmem:[%s7 + $0x28] sm:$0xff]
    %v80 = vld [vmem:[%s7 + $0x30] sm:$0xff]
    %v81 = vld [vmem:[%s7 + $0x38] sm:$0xff]
    %v82 = vld [vmem:[%s8] sm:$0x1]
    %v83 = vld [vmem:[%s9] sm:$0x1]
    %v84 = vmul.f32 %v55, %v55
    %vm85 = vcmask 261120
    %v86 = vsel %vm85, %v84, 0.0
    %87 = vadd.xlane.f32.xlu0 %v86
    %v88 = vpop.xlane.xlu0 %87
    %v89 = vrcp.pop 32.0
    %v90 = vmul.f32 32.0, %v89
    %v91 = vsub.f32 1.0, %v90
    %v92 = vmul.f32 %v89, %v91
    %v93 = vadd.f32 %v89, %v92
    %vm94 = vweird.f32 %v89
    %v95 = vsel %vm94, %v89, %v93
    %v96 = vmul.f32 %v88, %v95
    %v97 = vadd.f32 %v96, 1e-06
    %v98 = vrsqrt.pop %v97
    %v99 = vmul.f32 %v98, %v97
    %v100 = vmul.f32 %v99, %v98
    %v101 = vmul.f32 0.5, %v100
    %v102 = vsub.f32 1.5, %v101
    %v103 = vmul.f32 %v98, %v102
    %vm104 = vweird.f32 %v97
    %vm105 = vweird.f32 %v98
    %vm106 = vmor %vm104, %vm105
    %v107 = vsel %vm106, %v98, %v103
    %v108 = vmul.f32 %v55, %v107
    %v110 = vperm.slane %v82, 0
    %v112 = vmul.f32 %v108, %v110
    %v114 = vsel %vm85, %v112, 0
    %116 = vmatpush.msra.mxu0 0.0
    %117 = vmatpush.msra.mxu0 0.0
    %118 = vmatpush.msra.mxu0 0.0
    %119 = vmatpush.msra.mxu0 0.0
    %120 = vmatpush.msra.mxu0 0.0
    %121 = vmatpush.msra.mxu0 0.0
    %122 = vmatpush.msra.mxu0 0.0
    %123 = vmatpush.msra.mxu0 0.0
    %124 = vmatpush.msra.mxu0 0.0
    %125 = vmatpush.msra.mxu0 0.0
    %126 = vmatpush.msra.mxu0 0.0
    %127 = vmatpush.msra.mxu0 0.0
    %128 = vmatpush.msra.mxu0 %v64
    %129 = vmatpush.msra.mxu0 %v62
    %130 = vmatpush.msra.mxu0 %v60
    %131 = vmatpush.msra.mxu0 %v58
    %132 = vmatmul.f32.gmra.mxu0 %v114
    %v133 = vpop.f32.mrf.mxu0
    %v134 = vadd.f32 0.0, %v133
    %135 = vdwg.mxu0
    %136 = vmatpush.msra.mxu0 0.0
    %137 = vmatpush.msra.mxu0 0.0
    %138 = vmatpush.msra.mxu0 0.0
    %139 = vmatpush.msra.mxu0 0.0
    %140 = vmatpush.msra.mxu0 0.0
    %141 = vmatpush.msra.mxu0 0.0
    %142 = vmatpush.msra.mxu0 0.0
    %143 = vmatpush.msra.mxu0 0.0
    %144 = vmatpush.msra.mxu0 0.0
    %145 = vmatpush.msra.mxu0 0.0
    %146 = vmatpush.msra.mxu0 0.0
    %147 = vmatpush.msra.mxu0 0.0
    %148 = vmatpush.msra.mxu0 %v65
    %149 = vmatpush.msra.mxu0 %v63
    %150 = vmatpush.msra.mxu0 %v61
    %151 = vmatpush.msra.mxu0 %v59
    %152 = vmatmul.f32.gmra.mxu0 %v114
    %v153 = vpop.f32.mrf.mxu0
    %v154 = vadd.f32 0.0, %v153
    %155 = vdwg.mxu0
    %v156 = vmul.f32 %v134, %v56
    %158 = vrot.lane.b32.xlu0 %v57, 96
    %v159 = vpop.permute.xlu0 %158
    %v161 = vmul.f32 %v134, %v159
    %163 = vrot.lane.b32.xlu0 %v161, 32
    %v164 = vpop.permute.xlu0 %163
    %v166 = vadd.f32 %v156, %v164
    %168 = vrot.lane.b32.xlu0 %v56, 32
    %v169 = vpop.permute.xlu0 %168
    %v171 = vmul.f32 %v134, %v169
    %v172 = vmul.f32 %v154, %v57
    %174 = vrot.lane.b32.xlu0 %v172, 32
    %v175 = vpop.permute.xlu0 %174
    %v177 = vadd.f32 %v171, %v175
    %v178 = vmul.f32 %v166, 0.35355338
    %180 = vrot.lane.b32.xlu0 %v177, 96
    %v181 = vpop.permute.xlu0 %180
    %vm182 = vcmask 64512
    %v184 = vsel %vm182, %v178, 0
    %v186 = vsel %vm182, %v181, 0
    %188 = vmatpush.xpose.msra.mxu0 0.0
    %189 = vmatpush.xpose.msra.mxu0 0.0
    %190 = vmatpush.xpose.msra.mxu0 0.0
    %191 = vmatpush.xpose.msra.mxu0 0.0
    %192 = vmatpush.xpose.msra.mxu0 0.0
    %193 = vmatpush.xpose.msra.mxu0 0.0
    %194 = vmatpush.xpose.msra.mxu0 0.0
    %195 = vmatpush.xpose.msra.mxu0 0.0
    %196 = vmatpush.xpose.msra.mxu0 0.0
    %197 = vmatpush.xpose.msra.mxu0 0.0
    %198 = vmatpush.xpose.msra.mxu0 0.0
    %199 = vmatpush.xpose.msra.mxu0 0.0
    %200 = vmatpush.xpose.msra.mxu0 0.0
    %201 = vmatpush.xpose.msra.mxu0 0.0
    %202 = vmatpush.xpose.msra.mxu0 0.0
    %203 = vmatpush.xpose.msra.mxu0 %v186
    %204 = vmatmul.f32.gmra.mxu0 %v184
    %v205 = vpop.f32.mrf.mxu0
    %v206 = vadd.f32 %v49, %v205
    %207 = vdwg.mxu0
    %v208 = vsel %vm182, %v206, -inf
    %209 = vmax.xlane.f32.xlu0 %v208
    %v210 = vpop.xlane.xlu0 %209
    %v211 = vsub.f32 %v206, %v210
    %v212 = vmul.f32 %v211, 1.442695
    %v213 = vpow.pop %v212
    %v214 = vsel %vm182, %v213, 0.0
    %215 = vadd.xlane.f32.xlu0 %v214
    %v216 = vpop.xlane.xlu0 %215
    %218 = vrot.lane.b32.xlu0 %v134, 64
    %v219 = vpop.permute.xlu0 %218
    %v222 = vsel %vm182, %v213, 0
    %224 = vmatpush.msra.mxu0 0.0
    %225 = vmatpush.msra.mxu0 0.0
    %226 = vmatpush.msra.mxu0 0.0
    %227 = vmatpush.msra.mxu0 0.0
    %228 = vmatpush.msra.mxu0 0.0
    %229 = vmatpush.msra.mxu0 0.0
    %230 = vmatpush.msra.mxu0 0.0
    %231 = vmatpush.msra.mxu0 0.0
    %232 = vmatpush.msra.mxu0 0.0
    %233 = vmatpush.msra.mxu0 0.0
    %234 = vmatpush.msra.mxu0 0.0
    %235 = vmatpush.msra.mxu0 0.0
    %236 = vmatpush.msra.mxu0 0.0
    %237 = vmatpush.msra.mxu0 0.0
    %238 = vmatpush.msra.mxu0 0.0
    %239 = vmatpush.msra.mxu0 %v219
    %240 = vmatmul.f32.gmra.mxu0 %v222
    %v241 = vpop.f32.mrf.mxu0
    %v242 = vadd.f32 0.0, %v241
    %243 = vdwg.mxu0
    %v244 = vrcp.pop %v216
    %v245 = vmul.f32 %v242, %v244
    %246 = vrot.lane.b32.xlu0 %v178, 120
    %v247 = vpop.permute.xlu0 %246
    %248 = vrot.lane.b32.xlu0 %v177, 88
    %v249 = vpop.permute.xlu0 %248
    %v250 = vsel %vm182, %v247, 0
    %v252 = vsel %vm182, %v249, 0
    %254 = vmatpush.xpose.msra.mxu0 0.0
    %255 = vmatpush.xpose.msra.mxu0 0.0
    %256 = vmatpush.xpose.msra.mxu0 0.0
    %257 = vmatpush.xpose.msra.mxu0 0.0
    %258 = vmatpush.xpose.msra.mxu0 0.0
    %259 = vmatpush.xpose.msra.mxu0 0.0
    %260 = vmatpush.xpose.msra.mxu0 0.0
    %261 = vmatpush.xpose.msra.mxu0 0.0
    %262 = vmatpush.xpose.msra.mxu0 0.0
    %263 = vmatpush.xpose.msra.mxu0 0.0
    %264 = vmatpush.xpose.msra.mxu0 0.0
    %265 = vmatpush.xpose.msra.mxu0 0.0
    %266 = vmatpush.xpose.msra.mxu0 0.0
    %267 = vmatpush.xpose.msra.mxu0 0.0
    %268 = vmatpush.xpose.msra.mxu0 0.0
    %269 = vmatpush.xpose.msra.mxu0 %v252
    %270 = vmatmul.f32.gmra.mxu0 %v250
    %v271 = vpop.f32.mrf.mxu0
    %v272 = vadd.f32 %v49, %v271
    %273 = vdwg.mxu0
    %v274 = vsel %vm182, %v272, -inf
    %275 = vmax.xlane.f32.xlu0 %v274
    %v276 = vpop.xlane.xlu0 %275
    %v277 = vsub.f32 %v272, %v276
    %v278 = vmul.f32 %v277, 1.442695
    %v279 = vpow.pop %v278
    %v280 = vsel %vm182, %v279, 0.0
    %281 = vadd.xlane.f32.xlu0 %v280
    %v282 = vpop.xlane.xlu0 %281
    %283 = vrot.lane.b32.xlu0 %v134, 56
    %v284 = vpop.permute.xlu0 %283
    %v287 = vsel %vm182, %v279, 0
    %289 = vmatpush.msra.mxu0 0.0
    %290 = vmatpush.msra.mxu0 0.0
    %291 = vmatpush.msra.mxu0 0.0
    %292 = vmatpush.msra.mxu0 0.0
    %293 = vmatpush.msra.mxu0 0.0
    %294 = vmatpush.msra.mxu0 0.0
    %295 = vmatpush.msra.mxu0 0.0
    %296 = vmatpush.msra.mxu0 0.0
    %297 = vmatpush.msra.mxu0 0.0
    %298 = vmatpush.msra.mxu0 0.0
    %299 = vmatpush.msra.mxu0 0.0
    %300 = vmatpush.msra.mxu0 0.0
    %301 = vmatpush.msra.mxu0 0.0
    %302 = vmatpush.msra.mxu0 0.0
    %303 = vmatpush.msra.mxu0 0.0
    %304 = vmatpush.msra.mxu0 %v284
    %305 = vmatmul.f32.gmra.mxu0 %v287
    %v306 = vpop.f32.mrf.mxu0
    %v307 = vadd.f32 0.0, %v306
    %308 = vdwg.mxu0
    %v309 = vrcp.pop %v282
    %v310 = vmul.f32 %v307, %v309
    %311 = vrot.lane.b32.xlu0 %v178, 112
    %v312 = vpop.permute.xlu0 %311
    %313 = vrot.lane.b32.xlu0 %v177, 80
    %v314 = vpop.permute.xlu0 %313
    %v315 = vsel %vm182, %v312, 0
    %v317 = vsel %vm182, %v314, 0
    %319 = vmatpush.xpose.msra.mxu0 0.0
    %320 = vmatpush.xpose.msra.mxu0 0.0
    %321 = vmatpush.xpose.msra.mxu0 0.0
    %322 = vmatpush.xpose.msra.mxu0 0.0
    %323 = vmatpush.xpose.msra.mxu0 0.0
    %324 = vmatpush.xpose.msra.mxu0 0.0
    %325 = vmatpush.xpose.msra.mxu0 0.0
    %326 = vmatpush.xpose.msra.mxu0 0.0
    %327 = vmatpush.xpose.msra.mxu0 0.0
    %328 = vmatpush.xpose.msra.mxu0 0.0
    %329 = vmatpush.xpose.msra.mxu0 0.0
    %330 = vmatpush.xpose.msra.mxu0 0.0
    %331 = vmatpush.xpose.msra.mxu0 0.0
    %332 = vmatpush.xpose.msra.mxu0 0.0
    %333 = vmatpush.xpose.msra.mxu0 0.0
    %334 = vmatpush.xpose.msra.mxu0 %v317
    %335 = vmatmul.f32.gmra.mxu0 %v315
    %v336 = vpop.f32.mrf.mxu0
    %v337 = vadd.f32 %v49, %v336
    %338 = vdwg.mxu0
    %v339 = vsel %vm182, %v337, -inf
    %340 = vmax.xlane.f32.xlu0 %v339
    %v341 = vpop.xlane.xlu0 %340
    %v342 = vsub.f32 %v337, %v341
    %v343 = vmul.f32 %v342, 1.442695
    %v344 = vpow.pop %v343
    %v345 = vsel %vm182, %v344, 0.0
    %346 = vadd.xlane.f32.xlu0 %v345
    %v347 = vpop.xlane.xlu0 %346
    %348 = vrot.lane.b32.xlu0 %v134, 48
    %v349 = vpop.permute.xlu0 %348
    %v352 = vsel %vm182, %v344, 0
    %354 = vmatpush.msra.mxu0 0.0
    %355 = vmatpush.msra.mxu0 0.0
    %356 = vmatpush.msra.mxu0 0.0
    %357 = vmatpush.msra.mxu0 0.0
    %358 = vmatpush.msra.mxu0 0.0
    %359 = vmatpush.msra.mxu0 0.0
    %360 = vmatpush.msra.mxu0 0.0
    %361 = vmatpush.msra.mxu0 0.0
    %362 = vmatpush.msra.mxu0 0.0
    %363 = vmatpush.msra.mxu0 0.0
    %364 = vmatpush.msra.mxu0 0.0
    %365 = vmatpush.msra.mxu0 0.0
    %366 = vmatpush.msra.mxu0 0.0
    %367 = vmatpush.msra.mxu0 0.0
    %368 = vmatpush.msra.mxu0 0.0
    %369 = vmatpush.msra.mxu0 %v349
    %370 = vmatmul.f32.gmra.mxu0 %v352
    %v371 = vpop.f32.mrf.mxu0
    %v372 = vadd.f32 0.0, %v371
    %373 = vdwg.mxu0
    %v374 = vrcp.pop %v347
    %v375 = vmul.f32 %v372, %v374
    %376 = vrot.lane.b32.xlu0 %v178, 104
    %v377 = vpop.permute.xlu0 %376
    %378 = vrot.lane.b32.xlu0 %v177, 72
    %v379 = vpop.permute.xlu0 %378
    %v380 = vsel %vm182, %v377, 0
    %v382 = vsel %vm182, %v379, 0
    %384 = vmatpush.xpose.msra.mxu0 0.0
    %385 = vmatpush.xpose.msra.mxu0 0.0
    %386 = vmatpush.xpose.msra.mxu0 0.0
    %387 = vmatpush.xpose.msra.mxu0 0.0
    %388 = vmatpush.xpose.msra.mxu0 0.0
    %389 = vmatpush.xpose.msra.mxu0 0.0
    %390 = vmatpush.xpose.msra.mxu0 0.0
    %391 = vmatpush.xpose.msra.mxu0 0.0
    %392 = vmatpush.xpose.msra.mxu0 0.0
    %393 = vmatpush.xpose.msra.mxu0 0.0
    %394 = vmatpush.xpose.msra.mxu0 0.0
    %395 = vmatpush.xpose.msra.mxu0 0.0
    %396 = vmatpush.xpose.msra.mxu0 0.0
    %397 = vmatpush.xpose.msra.mxu0 0.0
    %398 = vmatpush.xpose.msra.mxu0 0.0
    %399 = vmatpush.xpose.msra.mxu0 %v382
    %400 = vmatmul.f32.gmra.mxu0 %v380
    %v401 = vpop.f32.mrf.mxu0
    %v402 = vadd.f32 %v49, %v401
    %403 = vdwg.mxu0
    %v404 = vsel %vm182, %v402, -inf
    %405 = vmax.xlane.f32.xlu0 %v404
    %v406 = vpop.xlane.xlu0 %405
    %v407 = vsub.f32 %v402, %v406
    %v408 = vmul.f32 %v407, 1.442695
    %v409 = vpow.pop %v408
    %v410 = vsel %vm182, %v409, 0.0
    %411 = vadd.xlane.f32.xlu0 %v410
    %v412 = vpop.xlane.xlu0 %411
    %413 = vrot.lane.b32.xlu0 %v134, 40
    %v414 = vpop.permute.xlu0 %413
    %v417 = vsel %vm182, %v409, 0
    %419 = vmatpush.msra.mxu0 0.0
    %420 = vmatpush.msra.mxu0 0.0
    %421 = vmatpush.msra.mxu0 0.0
    %422 = vmatpush.msra.mxu0 0.0
    %423 = vmatpush.msra.mxu0 0.0
    %424 = vmatpush.msra.mxu0 0.0
    %425 = vmatpush.msra.mxu0 0.0
    %426 = vmatpush.msra.mxu0 0.0
    %427 = vmatpush.msra.mxu0 0.0
    %428 = vmatpush.msra.mxu0 0.0
    %429 = vmatpush.msra.mxu0 0.0
    %430 = vmatpush.msra.mxu0 0.0
    %431 = vmatpush.msra.mxu0 0.0
    %432 = vmatpush.msra.mxu0 0.0
    %433 = vmatpush.msra.mxu0 0.0
    %434 = vmatpush.msra.mxu0 %v414
    %435 = vmatmul.f32.gmra.mxu0 %v417
    %v436 = vpop.f32.mrf.mxu0
    %v437 = vadd.f32 0.0, %v436
    %438 = vdwg.mxu0
    %v439 = vrcp.pop %v412
    %v440 = vmul.f32 %v437, %v439
    %442 = vrot.lane.b32.xlu0 %v310, 8
    %v443 = vpop.permute.xlu0 %442
    %446 = vrot.lane.b32.xlu0 %v375, 16
    %v447 = vpop.permute.xlu0 %446
    %450 = vrot.lane.b32.xlu0 %v440, 24
    %v451 = vpop.permute.xlu0 %450
    %v453 = vsel %vm182, %v245, %v443
    %vm454 = vcmask 130048
    %v455 = vsel %vm454, %v453, %v447
    %vm456 = vcmask 195584
    %v457 = vsel %vm456, %v455, %v451
    %v459 = vsel %vm85, %v457, 0
    %461 = vmatpush.msra.mxu0 0.0
    %462 = vmatpush.msra.mxu0 0.0
    %463 = vmatpush.msra.mxu0 0.0
    %464 = vmatpush.msra.mxu0 0.0
    %465 = vmatpush.msra.mxu0 0.0
    %466 = vmatpush.msra.mxu0 0.0
    %467 = vmatpush.msra.mxu0 0.0
    %468 = vmatpush.msra.mxu0 0.0
    %469 = vmatpush.msra.mxu0 0.0
    %470 = vmatpush.msra.mxu0 0.0
    %471 = vmatpush.msra.mxu0 0.0
    %472 = vmatpush.msra.mxu0 0.0
    %473 = vmatpush.msra.mxu0 %v69
    %474 = vmatpush.msra.mxu0 %v68
    %475 = vmatpush.msra.mxu0 %v67
    %476 = vmatpush.msra.mxu0 %v66
    %477 = vmatmul.f32.gmra.mxu0 %v459
    %v478 = vpop.f32.mrf.mxu0
    %v479 = vadd.f32 0.0, %v478
    %480 = vdwg.mxu0
    %v481 = vadd.f32 %v55, %v479
    %v482 = vmul.f32 %v481, %v481
    %v483 = vsel %vm85, %v482, 0.0
    %484 = vadd.xlane.f32.xlu0 %v483
    %v485 = vpop.xlane.xlu0 %484
    %v486 = vmul.f32 %v485, %v95
    %v487 = vadd.f32 %v486, 1e-06
    %v488 = vrsqrt.pop %v487
    %v489 = vmul.f32 %v488, %v487
    %v490 = vmul.f32 %v489, %v488
    %v491 = vmul.f32 0.5, %v490
    %v492 = vsub.f32 1.5, %v491
    %v493 = vmul.f32 %v488, %v492
    %vm494 = vweird.f32 %v487
    %vm495 = vweird.f32 %v488
    %vm496 = vmor %vm494, %vm495
    %v497 = vsel %vm496, %v488, %v493
    %v498 = vmul.f32 %v481, %v497
    %v500 = vperm.slane %v83, 0
    %v502 = vmul.f32 %v498, %v500
    %v504 = vsel %vm85, %v502, 0
    %506 = vmatpush.msra.mxu0 0.0
    %507 = vmatpush.msra.mxu0 0.0
    %508 = vmatpush.msra.mxu0 0.0
    %509 = vmatpush.msra.mxu0 0.0
    %510 = vmatpush.msra.mxu0 0.0
    %511 = vmatpush.msra.mxu0 0.0
    %512 = vmatpush.msra.mxu0 0.0
    %513 = vmatpush.msra.mxu0 0.0
    %514 = vmatpush.msra.mxu0 0.0
    %515 = vmatpush.msra.mxu0 0.0
    %516 = vmatpush.msra.mxu0 0.0
    %517 = vmatpush.msra.mxu0 0.0
    %518 = vmatpush.msra.mxu0 %v73
    %519 = vmatpush.msra.mxu0 %v72
    %520 = vmatpush.msra.mxu0 %v71
    %521 = vmatpush.msra.mxu0 %v70
    %522 = vmatmul.f32.gmra.mxu0 %v504
    %v523 = vpop.f32.mrf.mxu0
    %v524 = vadd.f32 0.0, %v523
    %525 = vdwg.mxu0
    %v526 = vxor.u32 %v524, 2147483648
    %v527 = vmul.f32 %v526, 1.442695
    %v528 = vpow.pop %v527
    %v529 = vadd.f32 %v528, 1.0
    %v530 = vrcp.pop %v529
    %v531 = vmul.f32 %v529, %v530
    %v532 = vsub.f32 1.0, %v531
    %v533 = vmul.f32 %v530, %v532
    %v534 = vadd.f32 %v530, %v533
    %vm535 = vweird.f32 %v529
    %vm536 = vweird.f32 %v530
    %vm537 = vmor %vm535, %vm536
    %v538 = vsel %vm537, %v530, %v534
    %v539 = vand.u32 2147483647, %v529
    %vm540 = vcmp.eq.f32.partialorder %v539, 8.507059e+37
    %v541 = vand.u32 %v529, 2147483648
    %v542 = vor.u32 1.1754944e-38, %v541
    %v543 = vsel %vm540, %v542, %v538
    %v544 = vmul.f32 1.0, %v543
    %v545 = vmul.f32 %v524, %v544
    %547 = vrot.lane.b32.xlu0 %v524, 64
    %v548 = vpop.permute.xlu0 %547
    %v550 = vmul.f32 %v545, %v548
    %vm551 = vcmask 523264
    %v553 = vsel %vm551, %v550, 0
    %555 = vmatpush.msra.mxu0 0.0
    %556 = vmatpush.msra.mxu0 0.0
    %557 = vmatpush.msra.mxu0 0.0
    %558 = vmatpush.msra.mxu0 0.0
    %559 = vmatpush.msra.mxu0 0.0
    %560 = vmatpush.msra.mxu0 0.0
    %561 = vmatpush.msra.mxu0 0.0
    %562 = vmatpush.msra.mxu0 0.0
    %563 = vmatpush.msra.mxu0 %v81
    %564 = vmatpush.msra.mxu0 %v80
    %565 = vmatpush.msra.mxu0 %v79
    %566 = vmatpush.msra.mxu0 %v78
    %567 = vmatpush.msra.mxu0 %v77
    %568 = vmatpush.msra.mxu0 %v76
    %569 = vmatpush.msra.mxu0 %v75
    %570 = vmatpush.msra.mxu0 %v74
    %571 = vmatmul.f32.gmra.mxu0 %v553
    %v572 = vpop.f32.mrf.mxu0
    %v573 = vadd.f32 0.0, %v572
    %574 = vdwg.mxu0
    %v575 = vadd.f32 %v481, %v573
    %s576 = scalar_lea.vmem %s4, 64
    %v577 = vld [vmem:[%s576] sm:$0xff]
    %v578 = vld [vmem:[%s576 + $0x8] sm:$0xff]
    %v579 = vld [vmem:[%s576 + $0x10] sm:$0xff]
    %v580 = vld [vmem:[%s576 + $0x18] sm:$0xff]
    %v581 = vld [vmem:[%s576 + $0x20] sm:$0xff]
    %v582 = vld [vmem:[%s576 + $0x28] sm:$0xff]
    %v583 = vld [vmem:[%s576 + $0x30] sm:$0xff]
    %v584 = vld [vmem:[%s576 + $0x38] sm:$0xff]
    %s585 = scalar_lea.vmem %s5, 32
    %v586 = vld [vmem:[%s585] sm:$0xff]
    %v587 = vld [vmem:[%s585 + $0x8] sm:$0xff]
    %v588 = vld [vmem:[%s585 + $0x10] sm:$0xff]
    %v589 = vld [vmem:[%s585 + $0x18] sm:$0xff]
    %s590 = scalar_lea.vmem %s6, 32
    %v591 = vld [vmem:[%s590] sm:$0xff]
    %v592 = vld [vmem:[%s590 + $0x8] sm:$0xff]
    %v593 = vld [vmem:[%s590 + $0x10] sm:$0xff]
    %v594 = vld [vmem:[%s590 + $0x18] sm:$0xff]
    %s595 = scalar_lea.vmem %s7, 64
    %v596 = vld [vmem:[%s595] sm:$0xff]
    %v597 = vld [vmem:[%s595 + $0x8] sm:$0xff]
    %v598 = vld [vmem:[%s595 + $0x10] sm:$0xff]
    %v599 = vld [vmem:[%s595 + $0x18] sm:$0xff]
    %v600 = vld [vmem:[%s595 + $0x20] sm:$0xff]
    %v601 = vld [vmem:[%s595 + $0x28] sm:$0xff]
    %v602 = vld [vmem:[%s595 + $0x30] sm:$0xff]
    %v603 = vld [vmem:[%s595 + $0x38] sm:$0xff]
    %s604 = scalar_lea.vmem %s8, 1
    %v605 = vld [vmem:[%s604] sm:$0x1]
    %s606 = scalar_lea.vmem %s9, 1
    %v607 = vld [vmem:[%s606] sm:$0x1]
    %v608 = vmul.f32 %v575, %v575
    %v609 = vsel %vm85, %v608, 0.0
    %610 = vadd.xlane.f32.xlu0 %v609
    %v611 = vpop.xlane.xlu0 %610
    %v612 = vmul.f32 %v611, %v95
    %v613 = vadd.f32 %v612, 1e-06
    %v614 = vrsqrt.pop %v613
    %v615 = vmul.f32 %v614, %v613
    %v616 = vmul.f32 %v615, %v614
    %v617 = vmul.f32 0.5, %v616
    %v618 = vsub.f32 1.5, %v617
    %v619 = vmul.f32 %v614, %v618
    %vm620 = vweird.f32 %v613
    %vm621 = vweird.f32 %v614
    %vm622 = vmor %vm620, %vm621
    %v623 = vsel %vm622, %v614, %v619
    %v624 = vmul.f32 %v575, %v623
    %v626 = vperm.slane %v605, 0
    %v628 = vmul.f32 %v624, %v626
    %v630 = vsel %vm85, %v628, 0
    %632 = vmatpush.msra.mxu0 0.0
    %633 = vmatpush.msra.mxu0 0.0
    %634 = vmatpush.msra.mxu0 0.0
    %635 = vmatpush.msra.mxu0 0.0
    %636 = vmatpush.msra.mxu0 0.0
    %637 = vmatpush.msra.mxu0 0.0
    %638 = vmatpush.msra.mxu0 0.0
    %639 = vmatpush.msra.mxu0 0.0
    %640 = vmatpush.msra.mxu0 0.0
    %641 = vmatpush.msra.mxu0 0.0
    %642 = vmatpush.msra.mxu0 0.0
    %643 = vmatpush.msra.mxu0 0.0
    %644 = vmatpush.msra.mxu0 %v583
    %645 = vmatpush.msra.mxu0 %v581
    %646 = vmatpush.msra.mxu0 %v579
    %647 = vmatpush.msra.mxu0 %v577
    %648 = vmatmul.f32.gmra.mxu0 %v630
    %v649 = vpop.f32.mrf.mxu0
    %v650 = vadd.f32 0.0, %v649
    %651 = vdwg.mxu0
    %652 = vmatpush.msra.mxu0 0.0
    %653 = vmatpush.msra.mxu0 0.0
    %654 = vmatpush.msra.mxu0 0.0
    %655 = vmatpush.msra.mxu0 0.0
    %656 = vmatpush.msra.mxu0 0.0
    %657 = vmatpush.msra.mxu0 0.0
    %658 = vmatpush.msra.mxu0 0.0
    %659 = vmatpush.msra.mxu0 0.0
    %660 = vmatpush.msra.mxu0 0.0
    %661 = vmatpush.msra.mxu0 0.0
    %662 = vmatpush.msra.mxu0 0.0
    %663 = vmatpush.msra.mxu0 0.0
    %664 = vmatpush.msra.mxu0 %v584
    %665 = vmatpush.msra.mxu0 %v582
    %666 = vmatpush.msra.mxu0 %v580
    %667 = vmatpush.msra.mxu0 %v578
    %668 = vmatmul.f32.gmra.mxu0 %v630
    %v669 = vpop.f32.mrf.mxu0
    %v670 = vadd.f32 0.0, %v669
    %671 = vdwg.mxu0
    %v672 = vmul.f32 %v650, %v56
    %v673 = vmul.f32 %v650, %v159
    %675 = vrot.lane.b32.xlu0 %v673, 32
    %v676 = vpop.permute.xlu0 %675
    %v678 = vadd.f32 %v672, %v676
    %v679 = vmul.f32 %v650, %v169
    %v680 = vmul.f32 %v670, %v57
    %682 = vrot.lane.b32.xlu0 %v680, 32
    %v683 = vpop.permute.xlu0 %682
    %v685 = vadd.f32 %v679, %v683
    %v686 = vmul.f32 %v678, 0.35355338
    %688 = vrot.lane.b32.xlu0 %v685, 96
    %v689 = vpop.permute.xlu0 %688
    %v691 = vsel %vm182, %v686, 0
    %v693 = vsel %vm182, %v689, 0
    %695 = vmatpush.xpose.msra.mxu0 0.0
    %696 = vmatpush.xpose.msra.mxu0 0.0
    %697 = vmatpush.xpose.msra.mxu0 0.0
    %698 = vmatpush.xpose.msra.mxu0 0.0
    %699 = vmatpush.xpose.msra.mxu0 0.0
    %700 = vmatpush.xpose.msra.mxu0 0.0
    %701 = vmatpush.xpose.msra.mxu0 0.0
    %702 = vmatpush.xpose.msra.mxu0 0.0
    %703 = vmatpush.xpose.msra.mxu0 0.0
    %704 = vmatpush.xpose.msra.mxu0 0.0
    %705 = vmatpush.xpose.msra.mxu0 0.0
    %706 = vmatpush.xpose.msra.mxu0 0.0
    %707 = vmatpush.xpose.msra.mxu0 0.0
    %708 = vmatpush.xpose.msra.mxu0 0.0
    %709 = vmatpush.xpose.msra.mxu0 0.0
    %710 = vmatpush.xpose.msra.mxu0 %v693
    %711 = vmatmul.f32.gmra.mxu0 %v691
    %v712 = vpop.f32.mrf.mxu0
    %v713 = vadd.f32 %v49, %v712
    %714 = vdwg.mxu0
    %v715 = vsel %vm182, %v713, -inf
    %716 = vmax.xlane.f32.xlu0 %v715
    %v717 = vpop.xlane.xlu0 %716
    %v718 = vsub.f32 %v713, %v717
    %v719 = vmul.f32 %v718, 1.442695
    %v720 = vpow.pop %v719
    %v721 = vsel %vm182, %v720, 0.0
    %722 = vadd.xlane.f32.xlu0 %v721
    %v723 = vpop.xlane.xlu0 %722
    %725 = vrot.lane.b32.xlu0 %v650, 64
    %v726 = vpop.permute.xlu0 %725
    %v729 = vsel %vm182, %v720, 0
    %731 = vmatpush.msra.mxu0 0.0
    %732 = vmatpush.msra.mxu0 0.0
    %733 = vmatpush.msra.mxu0 0.0
    %734 = vmatpush.msra.mxu0 0.0
    %735 = vmatpush.msra.mxu0 0.0
    %736 = vmatpush.msra.mxu0 0.0
    %737 = vmatpush.msra.mxu0 0.0
    %738 = vmatpush.msra.mxu0 0.0
    %739 = vmatpush.msra.mxu0 0.0
    %740 = vmatpush.msra.mxu0 0.0
    %741 = vmatpush.msra.mxu0 0.0
    %742 = vmatpush.msra.mxu0 0.0
    %743 = vmatpush.msra.mxu0 0.0
    %744 = vmatpush.msra.mxu0 0.0
    %745 = vmatpush.msra.mxu0 0.0
    %746 = vmatpush.msra.mxu0 %v726
    %747 = vmatmul.f32.gmra.mxu0 %v729
    %v748 = vpop.f32.mrf.mxu0
    %v749 = vadd.f32 0.0, %v748
    %750 = vdwg.mxu0
    %v751 = vrcp.pop %v723
    %v752 = vmul.f32 %v749, %v751
    %753 = vrot.lane.b32.xlu0 %v686, 120
    %v754 = vpop.permute.xlu0 %753
    %755 = vrot.lane.b32.xlu0 %v685, 88
    %v756 = vpop.permute.xlu0 %755
    %v757 = vsel %vm182, %v754, 0
    %v759 = vsel %vm182, %v756, 0
    %761 = vmatpush.xpose.msra.mxu0 0.0
    %762 = vmatpush.xpose.msra.mxu0 0.0
    %763 = vmatpush.xpose.msra.mxu0 0.0
    %764 = vmatpush.xpose.msra.mxu0 0.0
    %765 = vmatpush.xpose.msra.mxu0 0.0
    %766 = vmatpush.xpose.msra.mxu0 0.0
    %767 = vmatpush.xpose.msra.mxu0 0.0
    %768 = vmatpush.xpose.msra.mxu0 0.0
    %769 = vmatpush.xpose.msra.mxu0 0.0
    %770 = vmatpush.xpose.msra.mxu0 0.0
    %771 = vmatpush.xpose.msra.mxu0 0.0
    %772 = vmatpush.xpose.msra.mxu0 0.0
    %773 = vmatpush.xpose.msra.mxu0 0.0
    %774 = vmatpush.xpose.msra.mxu0 0.0
    %775 = vmatpush.xpose.msra.mxu0 0.0
    %776 = vmatpush.xpose.msra.mxu0 %v759
    %777 = vmatmul.f32.gmra.mxu0 %v757
    %v778 = vpop.f32.mrf.mxu0
    %v779 = vadd.f32 %v49, %v778
    %780 = vdwg.mxu0
    %v781 = vsel %vm182, %v779, -inf
    %782 = vmax.xlane.f32.xlu0 %v781
    %v783 = vpop.xlane.xlu0 %782
    %v784 = vsub.f32 %v779, %v783
    %v785 = vmul.f32 %v784, 1.442695
    %v786 = vpow.pop %v785
    %v787 = vsel %vm182, %v786, 0.0
    %788 = vadd.xlane.f32.xlu0 %v787
    %v789 = vpop.xlane.xlu0 %788
    %790 = vrot.lane.b32.xlu0 %v650, 56
    %v791 = vpop.permute.xlu0 %790
    %v794 = vsel %vm182, %v786, 0
    %796 = vmatpush.msra.mxu0 0.0
    %797 = vmatpush.msra.mxu0 0.0
    %798 = vmatpush.msra.mxu0 0.0
    %799 = vmatpush.msra.mxu0 0.0
    %800 = vmatpush.msra.mxu0 0.0
    %801 = vmatpush.msra.mxu0 0.0
    %802 = vmatpush.msra.mxu0 0.0
    %803 = vmatpush.msra.mxu0 0.0
    %804 = vmatpush.msra.mxu0 0.0
    %805 = vmatpush.msra.mxu0 0.0
    %806 = vmatpush.msra.mxu0 0.0
    %807 = vmatpush.msra.mxu0 0.0
    %808 = vmatpush.msra.mxu0 0.0
    %809 = vmatpush.msra.mxu0 0.0
    %810 = vmatpush.msra.mxu0 0.0
    %811 = vmatpush.msra.mxu0 %v791
    %812 = vmatmul.f32.gmra.mxu0 %v794
    %v813 = vpop.f32.mrf.mxu0
    %v814 = vadd.f32 0.0, %v813
    %815 = vdwg.mxu0
    %v816 = vrcp.pop %v789
    %v817 = vmul.f32 %v814, %v816
    %818 = vrot.lane.b32.xlu0 %v686, 112
    %v819 = vpop.permute.xlu0 %818
    %820 = vrot.lane.b32.xlu0 %v685, 80
    %v821 = vpop.permute.xlu0 %820
    %v822 = vsel %vm182, %v819, 0
    %v824 = vsel %vm182, %v821, 0
    %826 = vmatpush.xpose.msra.mxu0 0.0
    %827 = vmatpush.xpose.msra.mxu0 0.0
    %828 = vmatpush.xpose.msra.mxu0 0.0
    %829 = vmatpush.xpose.msra.mxu0 0.0
    %830 = vmatpush.xpose.msra.mxu0 0.0
    %831 = vmatpush.xpose.msra.mxu0 0.0
    %832 = vmatpush.xpose.msra.mxu0 0.0
    %833 = vmatpush.xpose.msra.mxu0 0.0
    %834 = vmatpush.xpose.msra.mxu0 0.0
    %835 = vmatpush.xpose.msra.mxu0 0.0
    %836 = vmatpush.xpose.msra.mxu0 0.0
    %837 = vmatpush.xpose.msra.mxu0 0.0
    %838 = vmatpush.xpose.msra.mxu0 0.0
    %839 = vmatpush.xpose.msra.mxu0 0.0
    %840 = vmatpush.xpose.msra.mxu0 0.0
    %841 = vmatpush.xpose.msra.mxu0 %v824
    %842 = vmatmul.f32.gmra.mxu0 %v822
    %v843 = vpop.f32.mrf.mxu0
    %v844 = vadd.f32 %v49, %v843
    %845 = vdwg.mxu0
    %v846 = vsel %vm182, %v844, -inf
    %847 = vmax.xlane.f32.xlu0 %v846
    %v848 = vpop.xlane.xlu0 %847
    %v849 = vsub.f32 %v844, %v848
    %v850 = vmul.f32 %v849, 1.442695
    %v851 = vpow.pop %v850
    %v852 = vsel %vm182, %v851, 0.0
    %853 = vadd.xlane.f32.xlu0 %v852
    %v854 = vpop.xlane.xlu0 %853
    %855 = vrot.lane.b32.xlu0 %v650, 48
    %v856 = vpop.permute.xlu0 %855
    %v859 = vsel %vm182, %v851, 0
    %861 = vmatpush.msra.mxu0 0.0
    %862 = vmatpush.msra.mxu0 0.0
    %863 = vmatpush.msra.mxu0 0.0
    %864 = vmatpush.msra.mxu0 0.0
    %865 = vmatpush.msra.mxu0 0.0
    %866 = vmatpush.msra.mxu0 0.0
    %867 = vmatpush.msra.mxu0 0.0
    %868 = vmatpush.msra.mxu0 0.0
    %869 = vmatpush.msra.mxu0 0.0
    %870 = vmatpush.msra.mxu0 0.0
    %871 = vmatpush.msra.mxu0 0.0
    %872 = vmatpush.msra.mxu0 0.0
    %873 = vmatpush.msra.mxu0 0.0
    %874 = vmatpush.msra.mxu0 0.0
    %875 = vmatpush.msra.mxu0 0.0
    %876 = vmatpush.msra.mxu0 %v856
    %877 = vmatmul.f32.gmra.mxu0 %v859
    %v878 = vpop.f32.mrf.mxu0
    %v879 = vadd.f32 0.0, %v878
    %880 = vdwg.mxu0
    %v881 = vrcp.pop %v854
    %v882 = vmul.f32 %v879, %v881
    %883 = vrot.lane.b32.xlu0 %v686, 104
    %v884 = vpop.permute.xlu0 %883
    %885 = vrot.lane.b32.xlu0 %v685, 72
    %v886 = vpop.permute.xlu0 %885
    %v887 = vsel %vm182, %v884, 0
    %v889 = vsel %vm182, %v886, 0
    %891 = vmatpush.xpose.msra.mxu0 0.0
    %892 = vmatpush.xpose.msra.mxu0 0.0
    %893 = vmatpush.xpose.msra.mxu0 0.0
    %894 = vmatpush.xpose.msra.mxu0 0.0
    %895 = vmatpush.xpose.msra.mxu0 0.0
    %896 = vmatpush.xpose.msra.mxu0 0.0
    %897 = vmatpush.xpose.msra.mxu0 0.0
    %898 = vmatpush.xpose.msra.mxu0 0.0
    %899 = vmatpush.xpose.msra.mxu0 0.0
    %900 = vmatpush.xpose.msra.mxu0 0.0
    %901 = vmatpush.xpose.msra.mxu0 0.0
    %902 = vmatpush.xpose.msra.mxu0 0.0
    %903 = vmatpush.xpose.msra.mxu0 0.0
    %904 = vmatpush.xpose.msra.mxu0 0.0
    %905 = vmatpush.xpose.msra.mxu0 0.0
    %906 = vmatpush.xpose.msra.mxu0 %v889
    %907 = vmatmul.f32.gmra.mxu0 %v887
    %v908 = vpop.f32.mrf.mxu0
    %v909 = vadd.f32 %v49, %v908
    %910 = vdwg.mxu0
    %v911 = vsel %vm182, %v909, -inf
    %912 = vmax.xlane.f32.xlu0 %v911
    %v913 = vpop.xlane.xlu0 %912
    %v914 = vsub.f32 %v909, %v913
    %v915 = vmul.f32 %v914, 1.442695
    %v916 = vpow.pop %v915
    %v917 = vsel %vm182, %v916, 0.0
    %918 = vadd.xlane.f32.xlu0 %v917
    %v919 = vpop.xlane.xlu0 %918
    %920 = vrot.lane.b32.xlu0 %v650, 40
    %v921 = vpop.permute.xlu0 %920
    %v924 = vsel %vm182, %v916, 0
    %926 = vmatpush.msra.mxu0 0.0
    %927 = vmatpush.msra.mxu0 0.0
    %928 = vmatpush.msra.mxu0 0.0
    %929 = vmatpush.msra.mxu0 0.0
    %930 = vmatpush.msra.mxu0 0.0
    %931 = vmatpush.msra.mxu0 0.0
    %932 = vmatpush.msra.mxu0 0.0
    %933 = vmatpush.msra.mxu0 0.0
    %934 = vmatpush.msra.mxu0 0.0
    %935 = vmatpush.msra.mxu0 0.0
    %936 = vmatpush.msra.mxu0 0.0
    %937 = vmatpush.msra.mxu0 0.0
    %938 = vmatpush.msra.mxu0 0.0
    %939 = vmatpush.msra.mxu0 0.0
    %940 = vmatpush.msra.mxu0 0.0
    %941 = vmatpush.msra.mxu0 %v921
    %942 = vmatmul.f32.gmra.mxu0 %v924
    %v943 = vpop.f32.mrf.mxu0
    %v944 = vadd.f32 0.0, %v943
    %945 = vdwg.mxu0
    %v946 = vrcp.pop %v919
    %v947 = vmul.f32 %v944, %v946
    %949 = vrot.lane.b32.xlu0 %v817, 8
    %v950 = vpop.permute.xlu0 %949
    %953 = vrot.lane.b32.xlu0 %v882, 16
    %v954 = vpop.permute.xlu0 %953
    %957 = vrot.lane.b32.xlu0 %v947, 24
    %v958 = vpop.permute.xlu0 %957
    %v960 = vsel %vm182, %v752, %v950
    %v961 = vsel %vm454, %v960, %v954
    %v962 = vsel %vm456, %v961, %v958
    %v964 = vsel %vm85, %v962, 0
    %966 = vmatpush.msra.mxu0 0.0
    %967 = vmatpush.msra.mxu0 0.0
    %968 = vmatpush.msra.mxu0 0.0
    %969 = vmatpush.msra.mxu0 0.0
    %970 = vmatpush.msra.mxu0 0.0
    %971 = vmatpush.msra.mxu0 0.0
    %972 = vmatpush.msra.mxu0 0.0
    %973 = vmatpush.msra.mxu0 0.0
    %974 = vmatpush.msra.mxu0 0.0
    %975 = vmatpush.msra.mxu0 0.0
    %976 = vmatpush.msra.mxu0 0.0
    %977 = vmatpush.msra.mxu0 0.0
    %978 = vmatpush.msra.mxu0 %v589
    %979 = vmatpush.msra.mxu0 %v588
    %980 = vmatpush.msra.mxu0 %v587
    %981 = vmatpush.msra.mxu0 %v586
    %982 = vmatmul.f32.gmra.mxu0 %v964
    %v983 = vpop.f32.mrf.mxu0
    %v984 = vadd.f32 0.0, %v983
    %985 = vdwg.mxu0
    %v986 = vadd.f32 %v575, %v984
    %v987 = vmul.f32 %v986, %v986
    %v988 = vsel %vm85, %v987, 0.0
    %989 = vadd.xlane.f32.xlu0 %v988
    %v990 = vpop.xlane.xlu0 %989
    %v991 = vmul.f32 %v990, %v95
    %v992 = vadd.f32 %v991, 1e-06
    %v993 = vrsqrt.pop %v992
    %v994 = vmul.f32 %v993, %v992
    %v995 = vmul.f32 %v994, %v993
    %v996 = vmul.f32 0.5, %v995
    %v997 = vsub.f32 1.5, %v996
    %v998 = vmul.f32 %v993, %v997
    %vm999 = vweird.f32 %v992
    %vm1000 = vweird.f32 %v993
    %vm1001 = vmor %vm999, %vm1000
    %v1002 = vsel %vm1001, %v993, %v998
    %v1003 = vmul.f32 %v986, %v1002
    %v1005 = vperm.slane %v607, 0
    %v1007 = vmul.f32 %v1003, %v1005
    %v1009 = vsel %vm85, %v1007, 0
    %1011 = vmatpush.msra.mxu0 0.0
    %1012 = vmatpush.msra.mxu0 0.0
    %1013 = vmatpush.msra.mxu0 0.0
    %1014 = vmatpush.msra.mxu0 0.0
    %1015 = vmatpush.msra.mxu0 0.0
    %1016 = vmatpush.msra.mxu0 0.0
    %1017 = vmatpush.msra.mxu0 0.0
    %1018 = vmatpush.msra.mxu0 0.0
    %1019 = vmatpush.msra.mxu0 0.0
    %1020 = vmatpush.msra.mxu0 0.0
    %1021 = vmatpush.msra.mxu0 0.0
    %1022 = vmatpush.msra.mxu0 0.0
    %1023 = vmatpush.msra.mxu0 %v594
    %1024 = vmatpush.msra.mxu0 %v593
    %1025 = vmatpush.msra.mxu0 %v592
    %1026 = vmatpush.msra.mxu0 %v591
    %1027 = vmatmul.f32.gmra.mxu0 %v1009
    %v1028 = vpop.f32.mrf.mxu0
    %v1029 = vadd.f32 0.0, %v1028
    %1030 = vdwg.mxu0
    %v1031 = vxor.u32 %v1029, 2147483648
    %v1032 = vmul.f32 %v1031, 1.442695
    %v1033 = vpow.pop %v1032
    %v1034 = vadd.f32 %v1033, 1.0
    %v1035 = vrcp.pop %v1034
    %v1036 = vmul.f32 %v1034, %v1035
    %v1037 = vsub.f32 1.0, %v1036
    %v1038 = vmul.f32 %v1035, %v1037
    %v1039 = vadd.f32 %v1035, %v1038
    %vm1040 = vweird.f32 %v1034
    %vm1041 = vweird.f32 %v1035
    %vm1042 = vmor %vm1040, %vm1041
    %v1043 = vsel %vm1042, %v1035, %v1039
    %v1044 = vand.u32 2147483647, %v1034
    %vm1045 = vcmp.eq.f32.partialorder %v1044, 8.507059e+37
    %v1046 = vand.u32 %v1034, 2147483648
    %v1047 = vor.u32 1.1754944e-38, %v1046
    %v1048 = vsel %vm1045, %v1047, %v1043
    %v1049 = vmul.f32 1.0, %v1048
    %v1050 = vmul.f32 %v1029, %v1049
    %1052 = vrot.lane.b32.xlu0 %v1029, 64
    %v1053 = vpop.permute.xlu0 %1052
    %v1055 = vmul.f32 %v1050, %v1053
    %v1057 = vsel %vm551, %v1055, 0
    %1059 = vmatpush.msra.mxu0 0.0
    %1060 = vmatpush.msra.mxu0 0.0
    %1061 = vmatpush.msra.mxu0 0.0
    %1062 = vmatpush.msra.mxu0 0.0
    %1063 = vmatpush.msra.mxu0 0.0
    %1064 = vmatpush.msra.mxu0 0.0
    %1065 = vmatpush.msra.mxu0 0.0
    %1066 = vmatpush.msra.mxu0 0.0
    %1067 = vmatpush.msra.mxu0 %v603
    %1068 = vmatpush.msra.mxu0 %v602
    %1069 = vmatpush.msra.mxu0 %v601
    %1070 = vmatpush.msra.mxu0 %v600
    %1071 = vmatpush.msra.mxu0 %v599
    %1072 = vmatpush.msra.mxu0 %v598
    %1073 = vmatpush.msra.mxu0 %v597
    %1074 = vmatpush.msra.mxu0 %v596
    %1075 = vmatmul.f32.gmra.mxu0 %v1057
    %v1076 = vpop.f32.mrf.mxu0
    %v1077 = vadd.f32 0.0, %v1076
    %1078 = vdwg.mxu0
    %v1079 = vadd.f32 %v986, %v1077
    %1081 = vrot.lane.b32.xlu0 %v134, 96
    %v1082 = vpop.permute.xlu0 %1081
    %1084 = vrot.lane.b32.xlu0 %v685, 32
    %v1085 = vpop.permute.xlu0 %1084
    %1087 = vrot.lane.b32.xlu0 %v650, 32
    %v1088 = vpop.permute.xlu0 %1087
    %v1090 = vsel %vm85, %v181, %v1082
    %v1091 = vsel %vm551, %v1090, %v1085
    %vm1092 = vcmask 785408
    %v1093 = vsel %vm1092, %v1091, %v1088
    %1094 = vst [vmem:[%s13] sm:$0xff] %v1093
    %v1095 = vmul.f32 %v1079, %v1079
    %v1096 = vsel %vm85, %v1095, 0.0
    %1097 = vadd.xlane.f32.xlu0 %v1096
    %v1098 = vpop.xlane.xlu0 %1097
    %v1099 = vmul.f32 %v1098, %v95
    %v1100 = vadd.f32 %v1099, 1e-06
    %v1101 = vrsqrt.pop %v1100
    %v1102 = vmul.f32 %v1101, %v1100
    %v1103 = vmul.f32 %v1102, %v1101
    %v1104 = vmul.f32 0.5, %v1103
    %v1105 = vsub.f32 1.5, %v1104
    %v1106 = vmul.f32 %v1101, %v1105
    %vm1107 = vweird.f32 %v1100
    %vm1108 = vweird.f32 %v1101
    %vm1109 = vmor %vm1107, %vm1108
    %v1110 = vsel %vm1109, %v1101, %v1106
    %v1111 = vmul.f32 %v1079, %v1110
    %v1113 = vperm.slane %v50, 0
    %v1115 = vmul.f32 %v1111, %v1113
    %v1117 = vsel %vm85, %v1115, 0
    %1119 = vmatpush.msra.mxu0 0.0
    %1120 = vmatpush.msra.mxu0 0.0
    %1121 = vmatpush.msra.mxu0 0.0
    %1122 = vmatpush.msra.mxu0 0.0
    %1123 = vmatpush.msra.mxu0 0.0
    %1124 = vmatpush.msra.mxu0 0.0
    %1125 = vmatpush.msra.mxu0 0.0
    %1126 = vmatpush.msra.mxu0 0.0
    %1127 = vmatpush.msra.mxu0 0.0
    %1128 = vmatpush.msra.mxu0 0.0
    %1129 = vmatpush.msra.mxu0 0.0
    %1130 = vmatpush.msra.mxu0 0.0
    %1131 = vmatpush.msra.mxu0 %v54
    %1132 = vmatpush.msra.mxu0 %v53
    %1133 = vmatpush.msra.mxu0 %v52
    %1134 = vmatpush.msra.mxu0 %v51
    %1135 = vmatmul.f32.gmra.mxu0 %v1117
    %v1136 = vpop.f32.mrf.mxu0
    %v1137 = vadd.f32 0.0, %v1136
    %1138 = vdwg.mxu0
    %1139 = vst [vmem:[#allocation2] sm:$0xff] %v1137
    // Predicated region
    $region50: #{first_vicuna_forward.1} parent=1 // pred_check
      _
    $region51: #{first_vicuna_forward.1} parent=1 // pred_check_branch
      %1141 = sbr.rel (0) target = $region53
    $region52: #{first_vicuna_forward.1} parent=1 // pred_region
      %1143 = vsyncadd [#allocation3], 0
      %s1145 = sshll.u32 [#allocation2], 4
      %s1146 = int_to_ptr.vmem [resolvable:$true] %s1145
      %s1147 = sshll.u32 %s12, 4
      %s1148 = int_to_ptr.hbm [resolvable:$true] %s1147
      %1150 = dma.vmem_to_hbm [thread:$0]  %s1146, 128, %s1148, [#allocation3]
    $region53: #{first_vicuna_forward.1} parent=1 // pred_fallthru
      _
    // Predicated region
    $region54: #{first_vicuna_forward.1} parent=1 // pred_check
      _
    $region55: #{first_vicuna_forward.1} parent=1 // pred_check_branch
      %1152 = sbr.rel (0) target = $region57
    $region56: #{first_vicuna_forward.1} parent=1 // pred_region
      _
    $region57: #{first_vicuna_forward.1} parent=1 // pred_fallthru
      _
    // Predicated region
    $region58: #{first_vicuna_forward.1} parent=1 // pred_check
      _
    $region59: #{first_vicuna_forward.1} parent=1 // pred_check_branch
      %1154 = sbr.rel (0) target = $region61
    $region60: #{first_vicuna_forward.1} parent=1 // pred_region
      %1156 = dma.done [#allocation3], 128
    $region61: #{first_vicuna_forward.1} parent=1 // pred_fallthru
      _
    // Predicated region
    $region62: #{first_vicuna_forward.1} parent=1 // pred_check
      _
    $region63: #{first_vicuna_forward.1} parent=1 // pred_check_branch
      %1158 = sbr.rel (0) target = $region65
    $region64: #{first_vicuna_forward.1} parent=1 // pred_region
      _
    $region65: #{first_vicuna_forward.1} parent=1 // pred_fallthru
      _
    %1159 = vsyncpa [#allocation3], 1

</llo_original>
